<compile_context>
chip_gen: v7x
topology: tpu7x:2x2x1
jax: 0.10.0
libtpu: 0.0.40
codegen_flags: <defaults>
</compile_context>

<pallas_src>
import math
from functools import partial

import jax
import jax.numpy as jnp
from jax.experimental import pallas as pl
from jax.experimental.pallas import tpu as pltpu

LN_EPS = 1e-12                      # BERT layer_norm_eps
VMEM_LIMIT = 48 * 1024 * 1024       # raises v5e's 16 MiB default, leaves headroom on v7x (64 MiB)


# ---------------------------- tiling helpers ----------------------------

def _block_rows(m, target=256):
    """Largest row-block <= target that divides m and respects the sublane rule."""
    if m <= target:
        return m
    for bm in range(min(target, m), 0, -1):
        if m % bm == 0 and bm % 8 == 0:
            return bm
    return m


def _block_cols(n, target=4096):
    """Largest column-block <= target that divides n and is lane-aligned (128)."""
    if n <= target:
        return n
    for bn in range(min(target, n), 0, -1):
        if n % bn == 0 and bn % 128 == 0:
            return bn
    return n


# ---------------------------- Pallas kernels ----------------------------

def _dense_kernel(x_ref, w_ref, b_ref, o_ref, *, activation):
    # y = x @ W + b ; bf16 MXU operands, f32 accumulate; optional tanh (pooler).
    x = x_ref[...].astype(jnp.bfloat16)
    y = jnp.dot(x, w_ref[...], preferred_element_type=jnp.float32)
    y = y + b_ref[...]
    if activation == "tanh":
        y = jnp.tanh(y)
    o_ref[...] = y.astype(o_ref.dtype)


def dense(x, w, b, activation="none", block_m=256, block_n=4096):
    m, k = x.shape
    k2, n = w.shape
    assert k == k2
    bm = _block_rows(m, block_m)
    bn = _block_cols(n, block_n)
    cost = pl.CostEstimate(
        flops=2 * m * k * n,
        transcendentals=(m * n if activation == "tanh" else 0),
        bytes_accessed=4 * (m * k + m * n) + 2 * k * n)
    return pl.pallas_call(
        partial(_dense_kernel, activation=activation),
        out_shape=jax.ShapeDtypeStruct((m, n), jnp.float32),
        grid=(m // bm, n // bn),
        in_specs=[
            pl.BlockSpec((bm, k), lambda i, j: (i, 0)),
            pl.BlockSpec((k, bn), lambda i, j: (0, j)),     # weight panel; constant when n == bn
            pl.BlockSpec((1, bn), lambda i, j: (0, j)),
        ],
        out_specs=pl.BlockSpec((bm, bn), lambda i, j: (i, j)),
        compiler_params=pltpu.CompilerParams(
            dimension_semantics=("parallel", "parallel"),
            vmem_limit_bytes=VMEM_LIMIT),
        cost_estimate=cost,
    )(x, w.astype(jnp.bfloat16), b.reshape(1, n))


def _dense_add_ln_kernel(x_ref, w_ref, b_ref, r_ref, g_ref, bt_ref, o_ref):
    # out = LayerNorm(x @ W + b + residual) * gamma + beta   (fused matmul epilogue, f32 LN)
    x = x_ref[...].astype(jnp.bfloat16)
    y = jnp.dot(x, w_ref[...], preferred_element_type=jnp.float32)
    h = y + b_ref[...] + r_ref[...]
    mean = jnp.mean(h, axis=-1, keepdims=True)
    c = h - mean
    var = jnp.mean(c * c, axis=-1, keepdims=True)           # biased variance (torch LayerNorm)
    inv = jax.lax.rsqrt(var + LN_EPS)
    o_ref[...] = (c * inv) * g_ref[...] + bt_ref[...]


def dense_add_layernorm(x, w, b, residual, gamma, beta, block_m=256):
    m, k = x.shape
    k2, n = w.shape
    assert k == k2 and residual.shape == (m, n)
    bm = _block_rows(m, block_m)
    cost = pl.CostEstimate(
        flops=2 * m * k * n + 8 * m * n,
        transcendentals=0,
        bytes_accessed=4 * (m * k + 2 * m * n) + 2 * k * n)
    return pl.pallas_call(
        _dense_add_ln_kernel,
        out_shape=jax.ShapeDtypeStruct((m, n), jnp.float32),
        grid=(m // bm,),
        in_specs=[
            pl.BlockSpec((bm, k), lambda i: (i, 0)),
            pl.BlockSpec((k, n), lambda i: (0, 0)),          # full weight stays VMEM-resident
            pl.BlockSpec((1, n), lambda i: (0, 0)),
            pl.BlockSpec((bm, n), lambda i: (i, 0)),
            pl.BlockSpec((1, n), lambda i: (0, 0)),
            pl.BlockSpec((1, n), lambda i: (0, 0)),
        ],
        out_specs=pl.BlockSpec((bm, n), lambda i: (i, 0)),
        compiler_params=pltpu.CompilerParams(
            dimension_semantics=("parallel",),
            vmem_limit_bytes=VMEM_LIMIT),
        cost_estimate=cost,
    )(x, w.astype(jnp.bfloat16), b.reshape(1, n), residual,
      gamma.reshape(1, n), beta.reshape(1, n))


def _add_ln_kernel(x_ref, r_ref, g_ref, b_ref, o_ref):
    # out = LayerNorm(x + residual) * gamma + beta   (embeddings LN)
    h = x_ref[...] + r_ref[...]
    mean = jnp.mean(h, axis=-1, keepdims=True)
    c = h - mean
    var = jnp.mean(c * c, axis=-1, keepdims=True)
    inv = jax.lax.rsqrt(var + LN_EPS)
    o_ref[...] = (c * inv) * g_ref[...] + b_ref[...]


def add_layernorm(x, residual, gamma, beta, block_m=512):
    m, h = x.shape
    bm = _block_rows(m, block_m)
    return pl.pallas_call(
        _add_ln_kernel,
        out_shape=jax.ShapeDtypeStruct((m, h), jnp.float32),
        grid=(m // bm,),
        in_specs=[pl.BlockSpec((bm, h), lambda i: (i, 0)),
                  pl.BlockSpec((bm, h), lambda i: (i, 0)),
                  pl.BlockSpec((1, h), lambda i: (0, 0)),
                  pl.BlockSpec((1, h), lambda i: (0, 0))],
        out_specs=pl.BlockSpec((bm, h), lambda i: (i, 0)),
        compiler_params=pltpu.CompilerParams(
            dimension_semantics=("parallel",),
            vmem_limit_bytes=VMEM_LIMIT),
    )(x, residual, gamma.reshape(1, h), beta.reshape(1, h))


def _fused_qkv_attention_kernel(x_ref, w_ref, b_ref, m_ref, o_ref, qkv_ref,
                                *, num_heads, head_dim):
    # One batch row. x_ref: [S, H]; w_ref: [H, 3H] bf16 (Wq|Wk|Wv columns); b_ref: [1, 3H];
    # m_ref: additive mask row [1, S]; o_ref: lane-dense [S, H] context; qkv_ref: VMEM scratch.
    hdim = num_heads * head_dim
    scale = 1.0 / math.sqrt(head_dim)

    # Fused QKV projection: the [S, 3H] activation lives only in VMEM scratch.
    x = x_ref[...].astype(jnp.bfloat16)
    qkv_ref[...] = jnp.dot(x, w_ref[...], preferred_element_type=jnp.float32) + b_ref[...]

    mask = m_ref[...]                                          # [1, S] f32 additive
    ctx = []
    for h in range(num_heads):                                 # static unroll over heads
        lo = h * head_dim
        q = (qkv_ref[:, lo:lo + head_dim] * scale).astype(jnp.bfloat16)       # scale folded in
        k = qkv_ref[:, hdim + lo:hdim + lo + head_dim].astype(jnp.bfloat16)
        v = qkv_ref[:, 2 * hdim + lo:2 * hdim + lo + head_dim].astype(jnp.bfloat16)
        s = jax.lax.dot_general(q, k, (((1,), (1,)), ((), ())),
                                preferred_element_type=jnp.float32)           # [S, S]
        s = s + mask
        s = s - jnp.max(s, axis=-1, keepdims=True)
        p = jnp.exp(s)
        p = p * pl.reciprocal(jnp.sum(p, axis=-1, keepdims=True), approx=True)
        ctx.append(jnp.dot(p.astype(jnp.bfloat16), v,
                           preferred_element_type=jnp.float32))               # [S, hd]
    o_ref[...] = jnp.concatenate(ctx, axis=-1).astype(o_ref.dtype)            # [S, H]


def fused_qkv_attention(x, w_qkv, b_qkv, mask_add, num_heads):
    # x: [B, S, H] hidden states ; w_qkv: [H, 3H] ; mask_add: [B, 1, S] additive
    bsz, s, h = x.shape
    three_h = w_qkv.shape[1]
    hd = h // num_heads
    cost = pl.CostEstimate(
        flops=2 * bsz * s * h * three_h + 4 * bsz * num_heads * s * s * hd,
        transcendentals=bsz * num_heads * s * s,
        bytes_accessed=4 * bsz * s * (2 * h + 1) + 2 * h * three_h)
    return pl.pallas_call(
        partial(_fused_qkv_attention_kernel, num_heads=num_heads, head_dim=hd),
        out_shape=jax.ShapeDtypeStruct((bsz, s, h), jnp.float32),
        grid=(bsz,),
        in_specs=[pl.BlockSpec((None, s, h), lambda b: (b, 0, 0)),
                  pl.BlockSpec((h, three_h), lambda b: (0, 0)),   # QKV weight VMEM-resident
                  pl.BlockSpec((1, three_h), lambda b: (0, 0)),
                  pl.BlockSpec((None, 1, s), lambda b: (b, 0, 0))],
        out_specs=pl.BlockSpec((None, s, h), lambda b: (b, 0, 0)),
        scratch_shapes=[pltpu.VMEM((s, three_h), jnp.float32)],
        compiler_params=pltpu.CompilerParams(
            dimension_semantics=("parallel",),
            vmem_limit_bytes=VMEM_LIMIT),
        cost_estimate=cost,
    )(x, w_qkv.astype(jnp.bfloat16), b_qkv.reshape(1, three_h), mask_add)


# ---------------------------- model (glue orchestrating the kernels) ----------------------------

def bert_embeddings(params, input_ids, token_type_ids, position_ids):
    p = params["embeddings"]
    # TODO(synk): embedding-table gathers stay in JAX glue (data-dependent gather).
    we = jnp.take(p["word"], input_ids, axis=0)            # [B, S, H]
    te = jnp.take(p["token_type"], token_type_ids, axis=0)
    pe = jnp.take(p["position"], position_ids, axis=0)
    bsz, s, h = we.shape
    x = (we + te).reshape(bsz * s, h)
    out = add_layernorm(x, pe.reshape(bsz * s, h), p["ln_g"], p["ln_b"])
    return out.reshape(bsz, s, h)


def bert_layer(lp, x, mask_add, num_heads):
    bsz, s, h = x.shape
    x2 = x.reshape(bsz * s, h)

    # Fused QKV projection + all-head attention per batch row; the [B, S, 3H] QKV activation
    # never touches HBM and no head split/merge transposes are materialized.
    ctx = fused_qkv_attention(x, lp["w_qkv"], lp["b_qkv"], mask_add, num_heads)   # [B, S, H]

    # Output projection with fused residual-add + LayerNorm epilogue.
    x2 = dense_add_layernorm(ctx.reshape(bsz * s, h), lp["wo"], lp["bo"],
                             x2, lp["ln1_g"], lp["ln1_b"])

    inter = dense(x2, lp["wi"], lp["bi"])                              # [B*S, inter]
    # TODO(synk): exact erf-based GELU (HF hidden_act="gelu") kept in JAX glue because Mosaic's
    # erf lowering is not guaranteed; the surrounding matmuls + fused LN epilogues are Pallas.
    inter = jax.nn.gelu(inter, approximate=False)

    # FFN output projection with fused residual-add + LayerNorm epilogue.
    x2 = dense_add_layernorm(inter, lp["wf"], lp["bf"],
                             x2, lp["ln2_g"], lp["ln2_b"])
    return x2.reshape(bsz, s, h)


@partial(jax.jit, static_argnames=("num_heads",))
def simple_bert_forward(params, input_ids, attention_mask, token_type_ids, position_ids,
                        *, num_heads):
    bsz, s = input_ids.shape
    mask_add = attention_mask.reshape(bsz, 1, s)           # additive extended mask [B, 1, S]
    x = bert_embeddings(params, input_ids, token_type_ids, position_ids)
    for lp in params["layers"]:
        x = bert_layer(lp, x, mask_add, num_heads)
    sequence_output = x
    # BertPooler: tanh(dense(first token))
    first_token = sequence_output[:, 0, :]
    pooled = dense(first_token, params["pooler"]["w"], params["pooler"]["b"],
                   activation="tanh")
    return {"last_hidden_state": sequence_output, "pooler_output": pooled}


# ---------------------------- deterministic parameter init ----------------------------

def init_params(key, *, vocab_size, hidden, num_layers, num_heads, intermediate,
                max_position, type_vocab):
    del num_heads  # layout does not depend on head count
    def nrm(k, shape):
        return 0.02 * jax.random.normal(k, shape, dtype=jnp.float32)

    keys = iter(jax.random.split(key, 8 + num_layers * 8))
    params = {
        "embeddings": {
            "word": nrm(next(keys), (vocab_size, hidden)),
            "position": nrm(next(keys), (max_position, hidden)),
            "token_type": nrm(next(keys), (type_vocab, hidden)),
            "ln_g": jnp.ones((hidden,), jnp.float32),
            "ln_b": jnp.zeros((hidden,), jnp.float32),
        },
        "layers": [],
        "pooler": {"w": nrm(next(keys), (hidden, hidden)),
                   "b": jnp.zeros((hidden,), jnp.float32)},
    }
    for _ in range(num_layers):
        params["layers"].append({
            # fused QKV projection: columns are [ Wq | Wk | Wv ]
            "w_qkv": nrm(next(keys), (hidden, 3 * hidden)),
            "b_qkv": jnp.zeros((3 * hidden,), jnp.float32),
            "wo": nrm(next(keys), (hidden, hidden)), "bo": jnp.zeros((hidden,), jnp.float32),
            "ln1_g": jnp.ones((hidden,), jnp.float32), "ln1_b": jnp.zeros((hidden,), jnp.float32),
            "wi": nrm(next(keys), (hidden, intermediate)),
            "bi": jnp.zeros((intermediate,), jnp.float32),
            "wf": nrm(next(keys), (intermediate, hidden)),
            "bf": jnp.zeros((hidden,), jnp.float32),
            "ln2_g": jnp.ones((hidden,), jnp.float32), "ln2_b": jnp.zeros((hidden,), jnp.float32),
        })
    return params


if __name__ == "__main__":
    B, S = 2, 8
    VOCAB, HIDDEN, LAYERS, HEADS, INTER = 100, 32, 2, 4, 64
    MAX_POS, TYPE_VOCAB = 16, 2

    root = jax.random.PRNGKey(0)
    k_param, k_ids, k_type = jax.random.split(root, 3)
    params = init_params(k_param, vocab_size=VOCAB, hidden=HIDDEN, num_layers=LAYERS,
                         num_heads=HEADS, intermediate=INTER,
                         max_position=MAX_POS, type_vocab=TYPE_VOCAB)

    input_ids = jax.random.randint(k_ids, (B, S), 0, VOCAB, dtype=jnp.int32)
    token_type_ids = jax.random.randint(k_type, (B, S), 0, TYPE_VOCAB, dtype=jnp.int32)
    position_ids = jnp.broadcast_to(jnp.arange(S, dtype=jnp.int32), (B, S))

    # 0/1 padding mask -> additive "extended" mask (what SimpleBert's encoder adds to scores).
    pad_mask = jnp.array([[1.0] * S, [1.0] * (S - 2) + [0.0, 0.0]], dtype=jnp.float32)
    attention_mask = (1.0 - pad_mask)[:, None, None, :] * -1e9   # [B, 1, 1, S]

    out = simple_bert_forward(params, input_ids, attention_mask, token_type_ids, position_ids,
                              num_heads=HEADS)
    jax.block_until_ready(out)
    assert out["last_hidden_state"].shape == (B, S, HIDDEN)
    assert out["pooler_output"].shape == (B, HIDDEN)
    print("KERNEL_OK")
</pallas_src>

<mosaic_0001>
module attributes {stable_mosaic.version = 11 : i64} {
  func.func @_add_ln_kernel(%arg0: i32, %arg1: memref<16x32xf32, #tpu.memory_space<vmem>>, %arg2: memref<16x32xf32, #tpu.memory_space<vmem>>, %arg3: memref<1x32xf32, #tpu.memory_space<vmem>>, %arg4: memref<1x32xf32, #tpu.memory_space<vmem>>, %arg5: memref<16x32xf32, #tpu.memory_space<vmem>>) attributes {dimension_semantics = [#tpu.dimension_semantics<parallel>], iteration_bounds = array<i64: 1>, scalar_prefetch = 0 : i64, scratch_operands = 0 : i64, tpu.core_type = #tpu.core_type<tc>, window_params = [{transform_indices = @transform_0, window_bounds = array<i64: 16, 32>}, {transform_indices = @transform_1, window_bounds = array<i64: 16, 32>}, {pipeline_mode = #tpu.pipeline_mode<synchronous>, transform_indices = @transform_2, window_bounds = array<i64: 1, 32>}, {pipeline_mode = #tpu.pipeline_mode<synchronous>, transform_indices = @transform_3, window_bounds = array<i64: 1, 32>}, {transform_indices = @transform_4, window_bounds = array<i64: 16, 32>}]} {
    %c0 = arith.constant 0 : index
    %c0_0 = arith.constant 0 : index
    %0 = vector.load %arg1[%c0, %c0_0] : memref<16x32xf32, #tpu.memory_space<vmem>>, vector<16x32xf32>
    %c0_1 = arith.constant 0 : index
    %c0_2 = arith.constant 0 : index
    %1 = vector.load %arg2[%c0_1, %c0_2] : memref<16x32xf32, #tpu.memory_space<vmem>>, vector<16x32xf32>
    %2 = arith.addf %0, %1 : vector<16x32xf32>
    %cst = arith.constant dense<0.000000e+00> : vector<16xf32>
    %3 = vector.multi_reduction <add>, %2, %cst [1] : vector<16x32xf32> to vector<16xf32>
    %4 = vector.shape_cast %3 : vector<16xf32> to vector<16x1xf32>
    %cst_3 = arith.constant 3.200000e+01 : f32
    %5 = vector.broadcast %cst_3 : f32 to vector<16x1xf32>
    %6 = arith.divf %4, %5 : vector<16x1xf32>
    %7 = vector.broadcast %6 : vector<16x1xf32> to vector<16x32xf32>
    %8 = arith.subf %2, %7 : vector<16x32xf32>
    %9 = arith.mulf %8, %8 : vector<16x32xf32>
    %cst_4 = arith.constant dense<0.000000e+00> : vector<16xf32>
    %10 = vector.multi_reduction <add>, %9, %cst_4 [1] : vector<16x32xf32> to vector<16xf32>
    %11 = vector.shape_cast %10 : vector<16xf32> to vector<16x1xf32>
    %cst_5 = arith.constant 3.200000e+01 : f32
    %12 = vector.broadcast %cst_5 : f32 to vector<16x1xf32>
    %13 = arith.divf %11, %12 : vector<16x1xf32>
    %cst_6 = arith.constant 9.99999996E-13 : f32
    %14 = vector.broadcast %cst_6 : f32 to vector<16x1xf32>
    %15 = arith.addf %13, %14 : vector<16x1xf32>
    %16 = math.rsqrt %15 : vector<16x1xf32>
    %17 = vector.broadcast %16 : vector<16x1xf32> to vector<16x32xf32>
    %18 = arith.mulf %8, %17 : vector<16x32xf32>
    %c0_7 = arith.constant 0 : index
    %c0_8 = arith.constant 0 : index
    %19 = vector.load %arg3[%c0_7, %c0_8] : memref<1x32xf32, #tpu.memory_space<vmem>>, vector<1x32xf32>
    %20 = vector.broadcast %19 : vector<1x32xf32> to vector<16x32xf32>
    %21 = arith.mulf %18, %20 : vector<16x32xf32>
    %c0_9 = arith.constant 0 : index
    %c0_10 = arith.constant 0 : index
    %22 = vector.load %arg4[%c0_9, %c0_10] : memref<1x32xf32, #tpu.memory_space<vmem>>, vector<1x32xf32>
    %23 = vector.broadcast %22 : vector<1x32xf32> to vector<16x32xf32>
    %24 = arith.addf %21, %23 : vector<16x32xf32>
    %c0_11 = arith.constant 0 : index
    %c0_12 = arith.constant 0 : index
    %25 = vector.load %arg5[%c0_11, %c0_12] : memref<16x32xf32, #tpu.memory_space<vmem>>, vector<16x32xf32>
    tpu.vector_store %arg5[%c0_11, %c0_12], %24 {strides = array<i32>} : memref<16x32xf32, #tpu.memory_space<vmem>>, vector<16x32xf32>,
    return
  }
  func.func @transform_0(%arg0: i32) -> (i32, i32) {
    %c0_i32 = arith.constant 0 : i32
    %c0_i32_0 = arith.constant 0 : i32
    return %arg0, %c0_i32 : i32, i32
  }
  func.func @transform_1(%arg0: i32) -> (i32, i32) {
    %c0_i32 = arith.constant 0 : i32
    %c0_i32_0 = arith.constant 0 : i32
    return %arg0, %c0_i32 : i32, i32
  }
  func.func @transform_2(%arg0: i32) -> (i32, i32) {
    %c0_i32 = arith.constant 0 : i32
    %c0_i32_0 = arith.constant 0 : i32
    %c0_i32_1 = arith.constant 0 : i32
    return %c0_i32, %c0_i32_0 : i32, i32
  }
  func.func @transform_3(%arg0: i32) -> (i32, i32) {
    %c0_i32 = arith.constant 0 : i32
    %c0_i32_0 = arith.constant 0 : i32
    %c0_i32_1 = arith.constant 0 : i32
    return %c0_i32, %c0_i32_0 : i32, i32
  }
  func.func @transform_4(%arg0: i32) -> (i32, i32) {
    %c0_i32 = arith.constant 0 : i32
    %c0_i32_0 = arith.constant 0 : i32
    return %arg0, %c0_i32 : i32, i32
  }
}

module attributes {stable_mosaic.version = 11 : i64} {
  func.func @_dense_add_ln_kernel(%arg0: i32, %arg1: memref<16x32xf32, #tpu.memory_space<vmem>>, %arg2: memref<32x32xbf16, #tpu.memory_space<vmem>>, %arg3: memref<1x32xf32, #tpu.memory_space<vmem>>, %arg4: memref<16x32xf32, #tpu.memory_space<vmem>>, %arg5: memref<1x32xf32, #tpu.memory_space<vmem>>, %arg6: memref<1x32xf32, #tpu.memory_space<vmem>>, %arg7: memref<16x32xf32, #tpu.memory_space<vmem>>) attributes {dimension_semantics = [#tpu.dimension_semantics<parallel>], iteration_bounds = array<i64: 1>, scalar_prefetch = 0 : i64, scratch_operands = 0 : i64, tpu.core_type = #tpu.core_type<tc>, window_params = [{transform_indices = @transform_0, window_bounds = array<i64: 16, 32>}, {pipeline_mode = #tpu.pipeline_mode<synchronous>, transform_indices = @transform_1, window_bounds = array<i64: 32, 32>}, {pipeline_mode = #tpu.pipeline_mode<synchronous>, transform_indices = @transform_2, window_bounds = array<i64: 1, 32>}, {transform_indices = @transform_3, window_bounds = array<i64: 16, 32>}, {pipeline_mode = #tpu.pipeline_mode<synchronous>, transform_indices = @transform_4, window_bounds = array<i64: 1, 32>}, {pipeline_mode = #tpu.pipeline_mode<synchronous>, transform_indices = @transform_5, window_bounds = array<i64: 1, 32>}, {transform_indices = @transform_6, window_bounds = array<i64: 16, 32>}]} {
    %c0 = arith.constant 0 : index
    %c0_0 = arith.constant 0 : index
    %0 = vector.load %arg1[%c0, %c0_0] : memref<16x32xf32, #tpu.memory_space<vmem>>, vector<16x32xf32>
    %1 = arith.truncf %0 : vector<16x32xf32> to vector<16x32xbf16>
    %c0_1 = arith.constant 0 : index
    %c0_2 = arith.constant 0 : index
    %2 = vector.load %arg2[%c0_1, %c0_2] : memref<32x32xbf16, #tpu.memory_space<vmem>>, vector<32x32xbf16>
    %cst = arith.constant dense<0.000000e+00> : vector<16x32xf32>
    %3 = tpu.matmul %1, %2, %cst {dimension_numbers = #tpu.dot_dimension_numbers<[1], [0], [0], [1], [0, 0, 1, 1], [], []>} : vector<16x32xbf16>, vector<32x32xbf16>, vector<16x32xf32> -> vector<16x32xf32>
    %c0_3 = arith.constant 0 : index
    %c0_4 = arith.constant 0 : index
    %4 = vector.load %arg3[%c0_3, %c0_4] : memref<1x32xf32, #tpu.memory_space<vmem>>, vector<1x32xf32>
    %5 = vector.broadcast %4 : vector<1x32xf32> to vector<16x32xf32>
    %6 = arith.addf %3, %5 : vector<16x32xf32>
    %c0_5 = arith.constant 0 : index
    %c0_6 = arith.constant 0 : index
    %7 = vector.load %arg4[%c0_5, %c0_6] : memref<16x32xf32, #tpu.memory_space<vmem>>, vector<16x32xf32>
    %8 = arith.addf %6, %7 : vector<16x32xf32>
    %cst_7 = arith.constant dense<0.000000e+00> : vector<16xf32>
    %9 = vector.multi_reduction <add>, %8, %cst_7 [1] : vector<16x32xf32> to vector<16xf32>
    %10 = vector.shape_cast %9 : vector<16xf32> to vector<16x1xf32>
    %cst_8 = arith.constant 3.200000e+01 : f32
    %11 = vector.broadcast %cst_8 : f32 to vector<16x1xf32>
    %12 = arith.divf %10, %11 : vector<16x1xf32>
    %13 = vector.broadcast %12 : vector<16x1xf32> to vector<16x32xf32>
    %14 = arith.subf %8, %13 : vector<16x32xf32>
    %15 = arith.mulf %14, %14 : vector<16x32xf32>
    %cst_9 = arith.constant dense<0.000000e+00> : vector<16xf32>
    %16 = vector.multi_reduction <add>, %15, %cst_9 [1] : vector<16x32xf32> to vector<16xf32>
    %17 = vector.shape_cast %16 : vector<16xf32> to vector<16x1xf32>
    %cst_10 = arith.constant 3.200000e+01 : f32
    %18 = vector.broadcast %cst_10 : f32 to vector<16x1xf32>
    %19 = arith.divf %17, %18 : vector<16x1xf32>
    %cst_11 = arith.constant 9.99999996E-13 : f32
    %20 = vector.broadcast %cst_11 : f32 to vector<16x1xf32>
    %21 = arith.addf %19, %20 : vector<16x1xf32>
    %22 = math.rsqrt %21 : vector<16x1xf32>
    %23 = vector.broadcast %22 : vector<16x1xf32> to vector<16x32xf32>
    %24 = arith.mulf %14, %23 : vector<16x32xf32>
    %c0_12 = arith.constant 0 : index
    %c0_13 = arith.constant 0 : index
    %25 = vector.load %arg5[%c0_12, %c0_13] : memref<1x32xf32, #tpu.memory_space<vmem>>, vector<1x32xf32>
    %26 = vector.broadcast %25 : vector<1x32xf32> to vector<16x32xf32>
    %27 = arith.mulf %24, %26 : vector<16x32xf32>
    %c0_14 = arith.constant 0 : index
    %c0_15 = arith.constant 0 : index
    %28 = vector.load %arg6[%c0_14, %c0_15] : memref<1x32xf32, #tpu.memory_space<vmem>>, vector<1x32xf32>
    %29 = vector.broadcast %28 : vector<1x32xf32> to vector<16x32xf32>
    %30 = arith.addf %27, %29 : vector<16x32xf32>
    %c0_16 = arith.constant 0 : index
    %c0_17 = arith.constant 0 : index
    %31 = vector.load %arg7[%c0_16, %c0_17] : memref<16x32xf32, #tpu.memory_space<vmem>>, vector<16x32xf32>
    tpu.vector_store %arg7[%c0_16, %c0_17], %30 {strides = array<i32>} : memref<16x32xf32, #tpu.memory_space<vmem>>, vector<16x32xf32>,
    return
  }
  func.func @transform_0(%arg0: i32) -> (i32, i32) {
    %c0_i32 = arith.constant 0 : i32
    %c0_i32_0 = arith.constant 0 : i32
    return %arg0, %c0_i32 : i32, i32
  }
  func.func @transform_1(%arg0: i32) -> (i32, i32) {
    %c0_i32 = arith.constant 0 : i32
    %c0_i32_0 = arith.constant 0 : i32
    %c0_i32_1 = arith.constant 0 : i32
    return %c0_i32, %c0_i32_0 : i32, i32
  }
  func.func @transform_2(%arg0: i32) -> (i32, i32) {
    %c0_i32 = arith.constant 0 : i32
    %c0_i32_0 = arith.constant 0 : i32
    %c0_i32_1 = arith.constant 0 : i32
    return %c0_i32, %c0_i32_0 : i32, i32
  }
  func.func @transform_3(%arg0: i32) -> (i32, i32) {
    %c0_i32 = arith.constant 0 : i32
    %c0_i32_0 = arith.constant 0 : i32
    return %arg0, %c0_i32 : i32, i32
  }
  func.func @transform_4(%arg0: i32) -> (i32, i32) {
    %c0_i32 = arith.constant 0 : i32
    %c0_i32_0 = arith.constant 0 : i32
    %c0_i32_1 = arith.constant 0 : i32
    return %c0_i32, %c0_i32_0 : i32, i32
  }
  func.func @transform_5(%arg0: i32) -> (i32, i32) {
    %c0_i32 = arith.constant 0 : i32
    %c0_i32_0 = arith.constant 0 : i32
    %c0_i32_1 = arith.constant 0 : i32
    return %c0_i32, %c0_i32_0 : i32, i32
  }
  func.func @transform_6(%arg0: i32) -> (i32, i32) {
    %c0_i32 = arith.constant 0 : i32
    %c0_i32_0 = arith.constant 0 : i32
    return %arg0, %c0_i32 : i32, i32
  }
}

module attributes {stable_mosaic.version = 11 : i64} {
  func.func @_fused_qkv_attention_kernel(%arg0: i32, %arg1: memref<1x8x32xf32, #tpu.memory_space<vmem>>, %arg2: memref<32x96xbf16, #tpu.memory_space<vmem>>, %arg3: memref<1x96xf32, #tpu.memory_space<vmem>>, %arg4: memref<1x1x8xf32, #tpu.memory_space<vmem>>, %arg5: memref<1x8x32xf32, #tpu.memory_space<vmem>>, %arg6: memref<8x96xf32, #tpu.memory_space<vmem>>) attributes {dimension_semantics = [#tpu.dimension_semantics<parallel>], iteration_bounds = array<i64: 2>, scalar_prefetch = 0 : i64, scratch_operands = 1 : i64, tpu.core_type = #tpu.core_type<tc>, window_params = [{transform_indices = @transform_0, window_bounds = array<i64: 1, 8, 32>}, {pipeline_mode = #tpu.pipeline_mode<synchronous>, transform_indices = @transform_1, window_bounds = array<i64: 32, 96>}, {pipeline_mode = #tpu.pipeline_mode<synchronous>, transform_indices = @transform_2, window_bounds = array<i64: 1, 96>}, {transform_indices = @transform_3, window_bounds = array<i64: 1, 1, 8>}, {transform_indices = @transform_4, window_bounds = array<i64: 1, 8, 32>}]} {
    %c0 = arith.constant 0 : index
    %c0_0 = arith.constant 0 : index
    %c0_1 = arith.constant 0 : index
    %0 = vector.load %arg1[%c0, %c0_0, %c0_1] : memref<1x8x32xf32, #tpu.memory_space<vmem>>, vector<1x8x32xf32>
    %1 = vector.shape_cast %0 : vector<1x8x32xf32> to vector<8x32xf32>
    %2 = arith.truncf %1 : vector<8x32xf32> to vector<8x32xbf16>
    %c0_2 = arith.constant 0 : index
    %c0_3 = arith.constant 0 : index
    %3 = vector.load %arg2[%c0_2, %c0_3] : memref<32x96xbf16, #tpu.memory_space<vmem>>, vector<32x96xbf16>
    %cst = arith.constant dense<0.000000e+00> : vector<8x96xf32>
    %4 = tpu.matmul %2, %3, %cst {dimension_numbers = #tpu.dot_dimension_numbers<[1], [0], [0], [1], [0, 0, 1, 1], [], []>} : vector<8x32xbf16>, vector<32x96xbf16>, vector<8x96xf32> -> vector<8x96xf32>
    %c0_4 = arith.constant 0 : index
    %c0_5 = arith.constant 0 : index
    %5 = vector.load %arg3[%c0_4, %c0_5] : memref<1x96xf32, #tpu.memory_space<vmem>>, vector<1x96xf32>
    %6 = vector.broadcast %5 : vector<1x96xf32> to vector<8x96xf32>
    %7 = arith.addf %4, %6 : vector<8x96xf32>
    %c0_6 = arith.constant 0 : index
    %c0_7 = arith.constant 0 : index
    %8 = vector.load %arg6[%c0_6, %c0_7] : memref<8x96xf32, #tpu.memory_space<vmem>>, vector<8x96xf32>
    tpu.vector_store %arg6[%c0_6, %c0_7], %7 {strides = array<i32>} : memref<8x96xf32, #tpu.memory_space<vmem>>, vector<8x96xf32>,
    %c0_8 = arith.constant 0 : index
    %c0_9 = arith.constant 0 : index
    %c0_10 = arith.constant 0 : index
    %9 = vector.load %arg4[%c0_8, %c0_9, %c0_10] : memref<1x1x8xf32, #tpu.memory_space<vmem>>, vector<1x1x8xf32>
    %10 = vector.shape_cast %9 : vector<1x1x8xf32> to vector<1x8xf32>
    %c0_11 = arith.constant 0 : index
    %c0_12 = arith.constant 0 : index
    %11 = vector.load %arg6[%c0_11, %c0_12] : memref<8x96xf32, #tpu.memory_space<vmem>>, vector<8x8xf32>
    %cst_13 = arith.constant 0.353553385 : f32
    %12 = vector.broadcast %cst_13 : f32 to vector<8x8xf32>
    %13 = arith.mulf %11, %12 : vector<8x8xf32>
    %14 = arith.truncf %13 : vector<8x8xf32> to vector<8x8xbf16>
    %c0_14 = arith.constant 0 : index
    %c32 = arith.constant 32 : index
    %15 = vector.load %arg6[%c0_14, %c32] : memref<8x96xf32, #tpu.memory_space<vmem>>, vector<8x8xf32>
    %16 = arith.truncf %15 : vector<8x8xf32> to vector<8x8xbf16>
    %c0_15 = arith.constant 0 : index
    %c64 = arith.constant 64 : index
    %17 = vector.load %arg6[%c0_15, %c64] : memref<8x96xf32, #tpu.memory_space<vmem>>, vector<8x8xf32>
    %18 = arith.truncf %17 : vector<8x8xf32> to vector<8x8xbf16>
    %cst_16 = arith.constant dense<0.000000e+00> : vector<8x8xf32>
    %19 = tpu.matmul %14, %16, %cst_16 {dimension_numbers = #tpu.dot_dimension_numbers<[1], [1], [0], [0], [0, 0, 1, 0], [], []>} : vector<8x8xbf16>, vector<8x8xbf16>, vector<8x8xf32> -> vector<8x8xf32>
    %20 = vector.broadcast %10 : vector<1x8xf32> to vector<8x8xf32>
    %21 = arith.addf %19, %20 : vector<8x8xf32>
    %cst_17 = arith.constant dense<0xFF800000> : vector<8xf32>
    %22 = vector.multi_reduction <maximumf>, %21, %cst_17 [1] : vector<8x8xf32> to vector<8xf32>
    %23 = vector.shape_cast %22 : vector<8xf32> to vector<8x1xf32>
    %24 = vector.broadcast %23 : vector<8x1xf32> to vector<8x8xf32>
    %25 = arith.subf %21, %24 : vector<8x8xf32>
    %26 = math.exp %25 : vector<8x8xf32>
    %cst_18 = arith.constant dense<0.000000e+00> : vector<8xf32>
    %27 = vector.multi_reduction <add>, %26, %cst_18 [1] : vector<8x8xf32> to vector<8xf32>
    %28 = vector.shape_cast %27 : vector<8xf32> to vector<8x1xf32>
    %29 = tpu.reciprocal %28 {approx = true} : vector<8x1xf32> -> vector<8x1xf32>
    %30 = vector.broadcast %29 : vector<8x1xf32> to vector<8x8xf32>
    %31 = arith.mulf %26, %30 : vector<8x8xf32>
    %32 = arith.truncf %31 : vector<8x8xf32> to vector<8x8xbf16>
    %cst_19 = arith.constant dense<0.000000e+00> : vector<8x8xf32>
    %33 = tpu.matmul %32, %18, %cst_19 {dimension_numbers = #tpu.dot_dimension_numbers<[1], [0], [0], [1], [0, 0, 1, 1], [], []>} : vector<8x8xbf16>, vector<8x8xbf16>, vector<8x8xf32> -> vector<8x8xf32>
    %c0_20 = arith.constant 0 : index
    %c8 = arith.constant 8 : index
    %34 = vector.load %arg6[%c0_20, %c8] : memref<8x96xf32, #tpu.memory_space<vmem>>, vector<8x8xf32>
    %cst_21 = arith.constant 0.353553385 : f32
    %35 = vector.broadcast %cst_21 : f32 to vector<8x8xf32>
    %36 = arith.mulf %34, %35 : vector<8x8xf32>
    %37 = arith.truncf %36 : vector<8x8xf32> to vector<8x8xbf16>
    %c0_22 = arith.constant 0 : index
    %c40 = arith.constant 40 : index
    %38 = vector.load %arg6[%c0_22, %c40] : memref<8x96xf32, #tpu.memory_space<vmem>>, vector<8x8xf32>
    %39 = arith.truncf %38 : vector<8x8xf32> to vector<8x8xbf16>
    %c0_23 = arith.constant 0 : index
    %c72 = arith.constant 72 : index
    %40 = vector.load %arg6[%c0_23, %c72] : memref<8x96xf32, #tpu.memory_space<vmem>>, vector<8x8xf32>
    %41 = arith.truncf %40 : vector<8x8xf32> to vector<8x8xbf16>
    %cst_24 = arith.constant dense<0.000000e+00> : vector<8x8xf32>
    %42 = tpu.matmul %37, %39, %cst_24 {dimension_numbers = #tpu.dot_dimension_numbers<[1], [1], [0], [0], [0, 0, 1, 0], [], []>} : vector<8x8xbf16>, vector<8x8xbf16>, vector<8x8xf32> -> vector<8x8xf32>
    %43 = vector.broadcast %10 : vector<1x8xf32> to vector<8x8xf32>
    %44 = arith.addf %42, %43 : vector<8x8xf32>
    %cst_25 = arith.constant dense<0xFF800000> : vector<8xf32>
    %45 = vector.multi_reduction <maximumf>, %44, %cst_25 [1] : vector<8x8xf32> to vector<8xf32>
    %46 = vector.shape_cast %45 : vector<8xf32> to vector<8x1xf32>
    %47 = vector.broadcast %46 : vector<8x1xf32> to vector<8x8xf32>
    %48 = arith.subf %44, %47 : vector<8x8xf32>
    %49 = math.exp %48 : vector<8x8xf32>
    %cst_26 = arith.constant dense<0.000000e+00> : vector<8xf32>
    %50 = vector.multi_reduction <add>, %49, %cst_26 [1] : vector<8x8xf32> to vector<8xf32>
    %51 = vector.shape_cast %50 : vector<8xf32> to vector<8x1xf32>
    %52 = tpu.reciprocal %51 {approx = true} : vector<8x1xf32> -> vector<8x1xf32>
    %53 = vector.broadcast %52 : vector<8x1xf32> to vector<8x8xf32>
    %54 = arith.mulf %49, %53 : vector<8x8xf32>
    %55 = arith.truncf %54 : vector<8x8xf32> to vector<8x8xbf16>
    %cst_27 = arith.constant dense<0.000000e+00> : vector<8x8xf32>
    %56 = tpu.matmul %55, %41, %cst_27 {dimension_numbers = #tpu.dot_dimension_numbers<[1], [0], [0], [1], [0, 0, 1, 1], [], []>} : vector<8x8xbf16>, vector<8x8xbf16>, vector<8x8xf32> -> vector<8x8xf32>
    %c0_28 = arith.constant 0 : index
    %c16 = arith.constant 16 : index
    %57 = vector.load %arg6[%c0_28, %c16] : memref<8x96xf32, #tpu.memory_space<vmem>>, vector<8x8xf32>
    %cst_29 = arith.constant 0.353553385 : f32
    %58 = vector.broadcast %cst_29 : f32 to vector<8x8xf32>
    %59 = arith.mulf %57, %58 : vector<8x8xf32>
    %60 = arith.truncf %59 : vector<8x8xf32> to vector<8x8xbf16>
    %c0_30 = arith.constant 0 : index
    %c48 = arith.constant 48 : index
    %61 = vector.load %arg6[%c0_30, %c48] : memref<8x96xf32, #tpu.memory_space<vmem>>, vector<8x8xf32>
    %62 = arith.truncf %61 : vector<8x8xf32> to vector<8x8xbf16>
    %c0_31 = arith.constant 0 : index
    %c80 = arith.constant 80 : index
    %63 = vector.load %arg6[%c0_31, %c80] : memref<8x96xf32, #tpu.memory_space<vmem>>, vector<8x8xf32>
    %64 = arith.truncf %63 : vector<8x8xf32> to vector<8x8xbf16>
    %cst_32 = arith.constant dense<0.000000e+00> : vector<8x8xf32>
    %65 = tpu.matmul %60, %62, %cst_32 {dimension_numbers = #tpu.dot_dimension_numbers<[1], [1], [0], [0], [0, 0, 1, 0], [], []>} : vector<8x8xbf16>, vector<8x8xbf16>, vector<8x8xf32> -> vector<8x8xf32>
    %66 = vector.broadcast %10 : vector<1x8xf32> to vector<8x8xf32>
    %67 = arith.addf %65, %66 : vector<8x8xf32>
    %cst_33 = arith.constant dense<0xFF800000> : vector<8xf32>
    %68 = vector.multi_reduction <maximumf>, %67, %cst_33 [1] : vector<8x8xf32> to vector<8xf32>
    %69 = vector.shape_cast %68 : vector<8xf32> to vector<8x1xf32>
    %70 = vector.broadcast %69 : vector<8x1xf32> to vector<8x8xf32>
    %71 = arith.subf %67, %70 : vector<8x8xf32>
    %72 = math.exp %71 : vector<8x8xf32>
    %cst_34 = arith.constant dense<0.000000e+00> : vector<8xf32>
    %73 = vector.multi_reduction <add>, %72, %cst_34 [1] : vector<8x8xf32> to vector<8xf32>
    %74 = vector.shape_cast %73 : vector<8xf32> to vector<8x1xf32>
    %75 = tpu.reciprocal %74 {approx = true} : vector<8x1xf32> -> vector<8x1xf32>
    %76 = vector.broadcast %75 : vector<8x1xf32> to vector<8x8xf32>
    %77 = arith.mulf %72, %76 : vector<8x8xf32>
    %78 = arith.truncf %77 : vector<8x8xf32> to vector<8x8xbf16>
    %cst_35 = arith.constant dense<0.000000e+00> : vector<8x8xf32>
    %79 = tpu.matmul %78, %64, %cst_35 {dimension_numbers = #tpu.dot_dimension_numbers<[1], [0], [0], [1], [0, 0, 1, 1], [], []>} : vector<8x8xbf16>, vector<8x8xbf16>, vector<8x8xf32> -> vector<8x8xf32>
    %c0_36 = arith.constant 0 : index
    %c24 = arith.constant 24 : index
    %80 = vector.load %arg6[%c0_36, %c24] : memref<8x96xf32, #tpu.memory_space<vmem>>, vector<8x8xf32>
    %cst_37 = arith.constant 0.353553385 : f32
    %81 = vector.broadcast %cst_37 : f32 to vector<8x8xf32>
    %82 = arith.mulf %80, %81 : vector<8x8xf32>
    %83 = arith.truncf %82 : vector<8x8xf32> to vector<8x8xbf16>
    %c0_38 = arith.constant 0 : index
    %c56 = arith.constant 56 : index
    %84 = vector.load %arg6[%c0_38, %c56] : memref<8x96xf32, #tpu.memory_space<vmem>>, vector<8x8xf32>
    %85 = arith.truncf %84 : vector<8x8xf32> to vector<8x8xbf16>
    %c0_39 = arith.constant 0 : index
    %c88 = arith.constant 88 : index
    %86 = vector.load %arg6[%c0_39, %c88] : memref<8x96xf32, #tpu.memory_space<vmem>>, vector<8x8xf32>
    %87 = arith.truncf %86 : vector<8x8xf32> to vector<8x8xbf16>
    %cst_40 = arith.constant dense<0.000000e+00> : vector<8x8xf32>
    %88 = tpu.matmul %83, %85, %cst_40 {dimension_numbers = #tpu.dot_dimension_numbers<[1], [1], [0], [0], [0, 0, 1, 0], [], []>} : vector<8x8xbf16>, vector<8x8xbf16>, vector<8x8xf32> -> vector<8x8xf32>
    %89 = vector.broadcast %10 : vector<1x8xf32> to vector<8x8xf32>
    %90 = arith.addf %88, %89 : vector<8x8xf32>
    %cst_41 = arith.constant dense<0xFF800000> : vector<8xf32>
    %91 = vector.multi_reduction <maximumf>, %90, %cst_41 [1] : vector<8x8xf32> to vector<8xf32>
    %92 = vector.shape_cast %91 : vector<8xf32> to vector<8x1xf32>
    %93 = vector.broadcast %92 : vector<8x1xf32> to vector<8x8xf32>
    %94 = arith.subf %90, %93 : vector<8x8xf32>
    %95 = math.exp %94 : vector<8x8xf32>
    %cst_42 = arith.constant dense<0.000000e+00> : vector<8xf32>
    %96 = vector.multi_reduction <add>, %95, %cst_42 [1] : vector<8x8xf32> to vector<8xf32>
    %97 = vector.shape_cast %96 : vector<8xf32> to vector<8x1xf32>
    %98 = tpu.reciprocal %97 {approx = true} : vector<8x1xf32> -> vector<8x1xf32>
    %99 = vector.broadcast %98 : vector<8x1xf32> to vector<8x8xf32>
    %100 = arith.mulf %95, %99 : vector<8x8xf32>
    %101 = arith.truncf %100 : vector<8x8xf32> to vector<8x8xbf16>
    %cst_43 = arith.constant dense<0.000000e+00> : vector<8x8xf32>
    %102 = tpu.matmul %101, %87, %cst_43 {dimension_numbers = #tpu.dot_dimension_numbers<[1], [0], [0], [1], [0, 0, 1, 1], [], []>} : vector<8x8xbf16>, vector<8x8xbf16>, vector<8x8xf32> -> vector<8x8xf32>
    %103 = tpu.concatenate %33, %56, %79, %102 in 1 : vector<8x8xf32>, vector<8x8xf32>, vector<8x8xf32>, vector<8x8xf32> -> vector<8x32xf32>
    %c0_44 = arith.constant 0 : index
    %c0_45 = arith.constant 0 : index
    %c0_46 = arith.constant 0 : index
    %104 = vector.load %arg5[%c0_44, %c0_45, %c0_46] : memref<1x8x32xf32, #tpu.memory_space<vmem>>, vector<1x8x32xf32>
    %105 = vector.shape_cast %104 : vector<1x8x32xf32> to vector<8x32xf32>
    %106 = vector.shape_cast %103 : vector<8x32xf32> to vector<1x8x32xf32>
    tpu.vector_store %arg5[%c0_44, %c0_45, %c0_46], %106 {strides = array<i32>} : memref<1x8x32xf32, #tpu.memory_space<vmem>>, vector<1x8x32xf32>,
    return
  }
  func.func @transform_0(%arg0: i32) -> (i32, i32, i32) {
    %c0_i32 = arith.constant 0 : i32
    %c0_i32_0 = arith.constant 0 : i32
    %c0_i32_1 = arith.constant 0 : i32
    return %arg0, %c0_i32, %c0_i32_0 : i32, i32, i32
  }
  func.func @transform_1(%arg0: i32) -> (i32, i32) {
    %c0_i32 = arith.constant 0 : i32
    %c0_i32_0 = arith.constant 0 : i32
    %c0_i32_1 = arith.constant 0 : i32
    return %c0_i32, %c0_i32_0 : i32, i32
  }
  func.func @transform_2(%arg0: i32) -> (i32, i32) {
    %c0_i32 = arith.constant 0 : i32
    %c0_i32_0 = arith.constant 0 : i32
    %c0_i32_1 = arith.constant 0 : i32
    return %c0_i32, %c0_i32_0 : i32, i32
  }
  func.func @transform_3(%arg0: i32) -> (i32, i32, i32) {
    %c0_i32 = arith.constant 0 : i32
    %c0_i32_0 = arith.constant 0 : i32
    %c0_i32_1 = arith.constant 0 : i32
    return %arg0, %c0_i32, %c0_i32_0 : i32, i32, i32
  }
  func.func @transform_4(%arg0: i32) -> (i32, i32, i32) {
    %c0_i32 = arith.constant 0 : i32
    %c0_i32_0 = arith.constant 0 : i32
    %c0_i32_1 = arith.constant 0 : i32
    return %arg0, %c0_i32, %c0_i32_0 : i32, i32, i32
  }
}

module attributes {stable_mosaic.version = 11 : i64} {
  func.func @_dense_kernel(%arg0: i32, %arg1: i32, %arg2: memref<16x32xf32, #tpu.memory_space<vmem>>, %arg3: memref<32x64xbf16, #tpu.memory_space<vmem>>, %arg4: memref<1x64xf32, #tpu.memory_space<vmem>>, %arg5: memref<16x64xf32, #tpu.memory_space<vmem>>) attributes {dimension_semantics = [#tpu.dimension_semantics<parallel>, #tpu.dimension_semantics<parallel>], iteration_bounds = array<i64: 1, 1>, scalar_prefetch = 0 : i64, scratch_operands = 0 : i64, tpu.core_type = #tpu.core_type<tc>, window_params = [{transform_indices = @transform_0, window_bounds = array<i64: 16, 32>}, {transform_indices = @transform_1, window_bounds = array<i64: 32, 64>}, {transform_indices = @transform_2, window_bounds = array<i64: 1, 64>}, {transform_indices = @transform_3, window_bounds = array<i64: 16, 64>}]} {
    %c0 = arith.constant 0 : index
    %c0_0 = arith.constant 0 : index
    %0 = vector.load %arg2[%c0, %c0_0] : memref<16x32xf32, #tpu.memory_space<vmem>>, vector<16x32xf32>
    %1 = arith.truncf %0 : vector<16x32xf32> to vector<16x32xbf16>
    %c0_1 = arith.constant 0 : index
    %c0_2 = arith.constant 0 : index
    %2 = vector.load %arg3[%c0_1, %c0_2] : memref<32x64xbf16, #tpu.memory_space<vmem>>, vector<32x64xbf16>
    %cst = arith.constant dense<0.000000e+00> : vector<16x64xf32>
    %3 = tpu.matmul %1, %2, %cst {dimension_numbers = #tpu.dot_dimension_numbers<[1], [0], [0], [1], [0, 0, 1, 1], [], []>} : vector<16x32xbf16>, vector<32x64xbf16>, vector<16x64xf32> -> vector<16x64xf32>
    %c0_3 = arith.constant 0 : index
    %c0_4 = arith.constant 0 : index
    %4 = vector.load %arg4[%c0_3, %c0_4] : memref<1x64xf32, #tpu.memory_space<vmem>>, vector<1x64xf32>
    %5 = vector.broadcast %4 : vector<1x64xf32> to vector<16x64xf32>
    %6 = arith.addf %3, %5 : vector<16x64xf32>
    %c0_5 = arith.constant 0 : index
    %c0_6 = arith.constant 0 : index
    %7 = vector.load %arg5[%c0_5, %c0_6] : memref<16x64xf32, #tpu.memory_space<vmem>>, vector<16x64xf32>
    tpu.vector_store %arg5[%c0_5, %c0_6], %6 {strides = array<i32>} : memref<16x64xf32, #tpu.memory_space<vmem>>, vector<16x64xf32>,
    return
  }
  func.func @transform_0(%arg0: i32, %arg1: i32) -> (i32, i32) {
    %c0_i32 = arith.constant 0 : i32
    %c0_i32_0 = arith.constant 0 : i32
    return %arg0, %c0_i32 : i32, i32
  }
  func.func @transform_1(%arg0: i32, %arg1: i32) -> (i32, i32) {
    %c0_i32 = arith.constant 0 : i32
    %c0_i32_0 = arith.constant 0 : i32
    return %c0_i32, %arg1 : i32, i32
  }
  func.func @transform_2(%arg0: i32, %arg1: i32) -> (i32, i32) {
    %c0_i32 = arith.constant 0 : i32
    %c0_i32_0 = arith.constant 0 : i32
    return %c0_i32, %arg1 : i32, i32
  }
  func.func @transform_3(%arg0: i32, %arg1: i32) -> (i32, i32) {
    %c0_i32 = arith.constant 0 : i32
    return %arg0, %arg1 : i32, i32
  }
}

module attributes {stable_mosaic.version = 11 : i64} {
  func.func @_dense_add_ln_kernel(%arg0: i32, %arg1: memref<16x64xf32, #tpu.memory_space<vmem>>, %arg2: memref<64x32xbf16, #tpu.memory_space<vmem>>, %arg3: memref<1x32xf32, #tpu.memory_space<vmem>>, %arg4: memref<16x32xf32, #tpu.memory_space<vmem>>, %arg5: memref<1x32xf32, #tpu.memory_space<vmem>>, %arg6: memref<1x32xf32, #tpu.memory_space<vmem>>, %arg7: memref<16x32xf32, #tpu.memory_space<vmem>>) attributes {dimension_semantics = [#tpu.dimension_semantics<parallel>], iteration_bounds = array<i64: 1>, scalar_prefetch = 0 : i64, scratch_operands = 0 : i64, tpu.core_type = #tpu.core_type<tc>, window_params = [{transform_indices = @transform_0, window_bounds = array<i64: 16, 64>}, {pipeline_mode = #tpu.pipeline_mode<synchronous>, transform_indices = @transform_1, window_bounds = array<i64: 64, 32>}, {pipeline_mode = #tpu.pipeline_mode<synchronous>, transform_indices = @transform_2, window_bounds = array<i64: 1, 32>}, {transform_indices = @transform_3, window_bounds = array<i64: 16, 32>}, {pipeline_mode = #tpu.pipeline_mode<synchronous>, transform_indices = @transform_4, window_bounds = array<i64: 1, 32>}, {pipeline_mode = #tpu.pipeline_mode<synchronous>, transform_indices = @transform_5, window_bounds = array<i64: 1, 32>}, {transform_indices = @transform_6, window_bounds = array<i64: 16, 32>}]} {
    %c0 = arith.constant 0 : index
    %c0_0 = arith.constant 0 : index
    %0 = vector.load %arg1[%c0, %c0_0] : memref<16x64xf32, #tpu.memory_space<vmem>>, vector<16x64xf32>
    %1 = arith.truncf %0 : vector<16x64xf32> to vector<16x64xbf16>
    %c0_1 = arith.constant 0 : index
    %c0_2 = arith.constant 0 : index
    %2 = vector.load %arg2[%c0_1, %c0_2] : memref<64x32xbf16, #tpu.memory_space<vmem>>, vector<64x32xbf16>
    %cst = arith.constant dense<0.000000e+00> : vector<16x32xf32>
    %3 = tpu.matmul %1, %2, %cst {dimension_numbers = #tpu.dot_dimension_numbers<[1], [0], [0], [1], [0, 0, 1, 1], [], []>} : vector<16x64xbf16>, vector<64x32xbf16>, vector<16x32xf32> -> vector<16x32xf32>
    %c0_3 = arith.constant 0 : index
    %c0_4 = arith.constant 0 : index
    %4 = vector.load %arg3[%c0_3, %c0_4] : memref<1x32xf32, #tpu.memory_space<vmem>>, vector<1x32xf32>
    %5 = vector.broadcast %4 : vector<1x32xf32> to vector<16x32xf32>
    %6 = arith.addf %3, %5 : vector<16x32xf32>
    %c0_5 = arith.constant 0 : index
    %c0_6 = arith.constant 0 : index
    %7 = vector.load %arg4[%c0_5, %c0_6] : memref<16x32xf32, #tpu.memory_space<vmem>>, vector<16x32xf32>
    %8 = arith.addf %6, %7 : vector<16x32xf32>
    %cst_7 = arith.constant dense<0.000000e+00> : vector<16xf32>
    %9 = vector.multi_reduction <add>, %8, %cst_7 [1] : vector<16x32xf32> to vector<16xf32>
    %10 = vector.shape_cast %9 : vector<16xf32> to vector<16x1xf32>
    %cst_8 = arith.constant 3.200000e+01 : f32
    %11 = vector.broadcast %cst_8 : f32 to vector<16x1xf32>
    %12 = arith.divf %10, %11 : vector<16x1xf32>
    %13 = vector.broadcast %12 : vector<16x1xf32> to vector<16x32xf32>
    %14 = arith.subf %8, %13 : vector<16x32xf32>
    %15 = arith.mulf %14, %14 : vector<16x32xf32>
    %cst_9 = arith.constant dense<0.000000e+00> : vector<16xf32>
    %16 = vector.multi_reduction <add>, %15, %cst_9 [1] : vector<16x32xf32> to vector<16xf32>
    %17 = vector.shape_cast %16 : vector<16xf32> to vector<16x1xf32>
    %cst_10 = arith.constant 3.200000e+01 : f32
    %18 = vector.broadcast %cst_10 : f32 to vector<16x1xf32>
    %19 = arith.divf %17, %18 : vector<16x1xf32>
    %cst_11 = arith.constant 9.99999996E-13 : f32
    %20 = vector.broadcast %cst_11 : f32 to vector<16x1xf32>
    %21 = arith.addf %19, %20 : vector<16x1xf32>
    %22 = math.rsqrt %21 : vector<16x1xf32>
    %23 = vector.broadcast %22 : vector<16x1xf32> to vector<16x32xf32>
    %24 = arith.mulf %14, %23 : vector<16x32xf32>
    %c0_12 = arith.constant 0 : index
    %c0_13 = arith.constant 0 : index
    %25 = vector.load %arg5[%c0_12, %c0_13] : memref<1x32xf32, #tpu.memory_space<vmem>>, vector<1x32xf32>
    %26 = vector.broadcast %25 : vector<1x32xf32> to vector<16x32xf32>
    %27 = arith.mulf %24, %26 : vector<16x32xf32>
    %c0_14 = arith.constant 0 : index
    %c0_15 = arith.constant 0 : index
    %28 = vector.load %arg6[%c0_14, %c0_15] : memref<1x32xf32, #tpu.memory_space<vmem>>, vector<1x32xf32>
    %29 = vector.broadcast %28 : vector<1x32xf32> to vector<16x32xf32>
    %30 = arith.addf %27, %29 : vector<16x32xf32>
    %c0_16 = arith.constant 0 : index
    %c0_17 = arith.constant 0 : index
    %31 = vector.load %arg7[%c0_16, %c0_17] : memref<16x32xf32, #tpu.memory_space<vmem>>, vector<16x32xf32>
    tpu.vector_store %arg7[%c0_16, %c0_17], %30 {strides = array<i32>} : memref<16x32xf32, #tpu.memory_space<vmem>>, vector<16x32xf32>,
    return
  }
  func.func @transform_0(%arg0: i32) -> (i32, i32) {
    %c0_i32 = arith.constant 0 : i32
    %c0_i32_0 = arith.constant 0 : i32
    return %arg0, %c0_i32 : i32, i32
  }
  func.func @transform_1(%arg0: i32) -> (i32, i32) {
    %c0_i32 = arith.constant 0 : i32
    %c0_i32_0 = arith.constant 0 : i32
    %c0_i32_1 = arith.constant 0 : i32
    return %c0_i32, %c0_i32_0 : i32, i32
  }
  func.func @transform_2(%arg0: i32) -> (i32, i32) {
    %c0_i32 = arith.constant 0 : i32
    %c0_i32_0 = arith.constant 0 : i32
    %c0_i32_1 = arith.constant 0 : i32
    return %c0_i32, %c0_i32_0 : i32, i32
  }
  func.func @transform_3(%arg0: i32) -> (i32, i32) {
    %c0_i32 = arith.constant 0 : i32
    %c0_i32_0 = arith.constant 0 : i32
    return %arg0, %c0_i32 : i32, i32
  }
  func.func @transform_4(%arg0: i32) -> (i32, i32) {
    %c0_i32 = arith.constant 0 : i32
    %c0_i32_0 = arith.constant 0 : i32
    %c0_i32_1 = arith.constant 0 : i32
    return %c0_i32, %c0_i32_0 : i32, i32
  }
  func.func @transform_5(%arg0: i32) -> (i32, i32) {
    %c0_i32 = arith.constant 0 : i32
    %c0_i32_0 = arith.constant 0 : i32
    %c0_i32_1 = arith.constant 0 : i32
    return %c0_i32, %c0_i32_0 : i32, i32
  }
  func.func @transform_6(%arg0: i32) -> (i32, i32) {
    %c0_i32 = arith.constant 0 : i32
    %c0_i32_0 = arith.constant 0 : i32
    return %arg0, %c0_i32 : i32, i32
  }
}

module attributes {stable_mosaic.version = 11 : i64} {
  func.func @_dense_kernel(%arg0: i32, %arg1: i32, %arg2: memref<2x32xf32, #tpu.memory_space<vmem>>, %arg3: memref<32x32xbf16, #tpu.memory_space<vmem>>, %arg4: memref<1x32xf32, #tpu.memory_space<vmem>>, %arg5: memref<2x32xf32, #tpu.memory_space<vmem>>) attributes {dimension_semantics = [#tpu.dimension_semantics<parallel>, #tpu.dimension_semantics<parallel>], iteration_bounds = array<i64: 1, 1>, scalar_prefetch = 0 : i64, scratch_operands = 0 : i64, tpu.core_type = #tpu.core_type<tc>, window_params = [{transform_indices = @transform_0, window_bounds = array<i64: 2, 32>}, {transform_indices = @transform_1, window_bounds = array<i64: 32, 32>}, {transform_indices = @transform_2, window_bounds = array<i64: 1, 32>}, {transform_indices = @transform_3, window_bounds = array<i64: 2, 32>}]} {
    %c0 = arith.constant 0 : index
    %c0_0 = arith.constant 0 : index
    %0 = vector.load %arg2[%c0, %c0_0] : memref<2x32xf32, #tpu.memory_space<vmem>>, vector<2x32xf32>
    %1 = arith.truncf %0 : vector<2x32xf32> to vector<2x32xbf16>
    %c0_1 = arith.constant 0 : index
    %c0_2 = arith.constant 0 : index
    %2 = vector.load %arg3[%c0_1, %c0_2] : memref<32x32xbf16, #tpu.memory_space<vmem>>, vector<32x32xbf16>
    %cst = arith.constant dense<0.000000e+00> : vector<2x32xf32>
    %3 = tpu.matmul %1, %2, %cst {dimension_numbers = #tpu.dot_dimension_numbers<[1], [0], [0], [1], [0, 0, 1, 1], [], []>} : vector<2x32xbf16>, vector<32x32xbf16>, vector<2x32xf32> -> vector<2x32xf32>
    %c0_3 = arith.constant 0 : index
    %c0_4 = arith.constant 0 : index
    %4 = vector.load %arg4[%c0_3, %c0_4] : memref<1x32xf32, #tpu.memory_space<vmem>>, vector<1x32xf32>
    %5 = vector.broadcast %4 : vector<1x32xf32> to vector<2x32xf32>
    %6 = arith.addf %3, %5 : vector<2x32xf32>
    %7 = math.tanh %6 : vector<2x32xf32>
    %c0_5 = arith.constant 0 : index
    %c0_6 = arith.constant 0 : index
    %8 = vector.load %arg5[%c0_5, %c0_6] : memref<2x32xf32, #tpu.memory_space<vmem>>, vector<2x32xf32>
    tpu.vector_store %arg5[%c0_5, %c0_6], %7 {strides = array<i32>} : memref<2x32xf32, #tpu.memory_space<vmem>>, vector<2x32xf32>,
    return
  }
  func.func @transform_0(%arg0: i32, %arg1: i32) -> (i32, i32) {
    %c0_i32 = arith.constant 0 : i32
    %c0_i32_0 = arith.constant 0 : i32
    return %arg0, %c0_i32 : i32, i32
  }
  func.func @transform_1(%arg0: i32, %arg1: i32) -> (i32, i32) {
    %c0_i32 = arith.constant 0 : i32
    %c0_i32_0 = arith.constant 0 : i32
    return %c0_i32, %arg1 : i32, i32
  }
  func.func @transform_2(%arg0: i32, %arg1: i32) -> (i32, i32) {
    %c0_i32 = arith.constant 0 : i32
    %c0_i32_0 = arith.constant 0 : i32
    return %c0_i32, %arg1 : i32, i32
  }
  func.func @transform_3(%arg0: i32, %arg1: i32) -> (i32, i32) {
    %c0_i32 = arith.constant 0 : i32
    return %arg0, %arg1 : i32, i32
  }
}

</mosaic_0001>

<llo_original>
// kernel: simple_bert_forward.10
$region0: #{simple_bert_forward.10}
  #allocation0 [shape = 'u32[]', space=smem, size = 0x4, offset = 0x4, fixed_abs, tag = 'smem constant byte address 0x4 - core index']
  #allocation1 [shape = 'u32[144,128]{1,0:T(1,128)}', space=vmem, size = 0x12000, scoped, tag = 'internal scratch']
  %s0 = inlined_call_operand.vmem [shape: f32[16,32], index: 0, kind: input, shape index: {}]
  %s1 = inlined_call_operand.vmem [shape: f32[16,32], index: 1, kind: input, shape index: {}]
  %s2 = inlined_call_operand.vmem [shape: f32[1,32], index: 2, kind: input, shape index: {}]
  %s3 = inlined_call_operand.vmem [shape: f32[1,32], index: 3, kind: input, shape index: {}]
  %s4 = inlined_call_operand.vmem [shape: f32[16,32], index: 4, kind: output, shape index: {}]
  %s5 = sld [smem:[#allocation0]]
  $region26: #{simple_bert_forward.10} parent=0
    _
  %s7 = ssub.s32 1, %s5
  %s8 = scalar_select 0, %s7, %s5
  // Predicated region
  $region2: #{simple_bert_forward.10} parent=0 // pred_check
    _
  $region3: #{simple_bert_forward.10} parent=0 // pred_check_branch
    %10 = sbr.rel (0) target = $region5
  $region4: #{simple_bert_forward.10} parent=0 // pred_region
    _
  $region5: #{simple_bert_forward.10} parent=0 // pred_fallthru
    _
  // Predicated region
  $region6: #{simple_bert_forward.10} parent=0 // pred_check
    _
  $region7: #{simple_bert_forward.10} parent=0 // pred_check_branch
    %12 = sbr.rel (0) target = $region9
  $region8: #{simple_bert_forward.10} parent=0 // pred_region
    _
  $region9: #{simple_bert_forward.10} parent=0 // pred_fallthru
    _
  // Predicated region
  $region10: #{simple_bert_forward.10} parent=0 // pred_check
    _
  $region11: #{simple_bert_forward.10} parent=0 // pred_check_branch
    %14 = sbr.rel (0) target = $region13
  $region12: #{simple_bert_forward.10} parent=0 // pred_region
    _
  $region13: #{simple_bert_forward.10} parent=0 // pred_fallthru
    _
  // Predicated region
  $region14: #{simple_bert_forward.10} parent=0 // pred_check
    _
  $region15: #{simple_bert_forward.10} parent=0 // pred_check_branch
    %16 = sbr.rel (0) target = $region17
  $region16: #{simple_bert_forward.10} parent=0 // pred_region
    _
  $region17: #{simple_bert_forward.10} parent=0 // pred_fallthru
    _
  %v17 = vld [vmem:[%s0] sm:$0xff]
  %v18 = vld [vmem:[%s0 + $0x8] sm:$0xff]
  %v19 = vld [vmem:[%s1] sm:$0xff]
  %v20 = vld [vmem:[%s1 + $0x8] sm:$0xff]
  %v21 = vadd.f32 %v17, %v19
  %v22 = vadd.f32 %v18, %v20
  %vm23 = vcmask 261120
  %v24 = vsel %vm23, %v21, 0.0
  %25 = vadd.xlane.f32.xlu0 %v24
  %v26 = vpop.xlane.xlu0 %25
  %v27 = vsel %vm23, %v22, 0.0
  %28 = vadd.xlane.f32.xlu0 %v27
  %v29 = vpop.xlane.xlu0 %28
  %v30 = vrcp.pop 32.0
  %v31 = vmul.f32 %v26, %v30
  %v32 = vmul.f32 %v29, %v30
  %v33 = vsub.f32 %v21, %v31
  %v34 = vsub.f32 %v22, %v32
  %v35 = vmul.f32 %v33, %v33
  %v36 = vmul.f32 %v34, %v34
  %v37 = vsel %vm23, %v35, 0.0
  %38 = vadd.xlane.f32.xlu0 %v37
  %v39 = vpop.xlane.xlu0 %38
  %v40 = vsel %vm23, %v36, 0.0
  %41 = vadd.xlane.f32.xlu0 %v40
  %v42 = vpop.xlane.xlu0 %41
  %v43 = vmul.f32 %v39, %v30
  %v44 = vmul.f32 %v42, %v30
  %v45 = vadd.f32 %v43, 1e-12
  %v46 = vadd.f32 %v44, 1e-12
  %v47 = vrsqrt.pop %v45
  %v48 = vrsqrt.pop %v46
  %v49 = vmul.f32 %v33, %v47
  %v50 = vmul.f32 %v34, %v48
  %v51 = vld [vmem:[%s2] sm:$0x1]
  %v53 = vlaneseq
  %v54 = vshrl.u32 %v53, 7
  %v55 = vsub.s32 0, %v54
  %v56 = vrot.slane %v51, %v55
  %v58 = vmul.f32 %v49, %v56
  %v59 = vmul.f32 %v50, %v56
  %v60 = vld [vmem:[%s3] sm:$0x1]
  %v62 = vlaneseq
  %v63 = vshrl.u32 %v62, 7
  %v64 = vsub.s32 0, %v63
  %v65 = vrot.slane %v60, %v64
  %v67 = vadd.f32 %v58, %v65
  %v68 = vadd.f32 %v59, %v65
  %69 = vst.msk [vmem:[%s4] sm:$0xff] %vm23, %v67
  %70 = vst.msk [vmem:[%s4 + $0x8] sm:$0xff] %vm23, %v68
  // Predicated region
  $region18: #{simple_bert_forward.10} parent=0 // pred_check
    _
  $region19: #{simple_bert_forward.10} parent=0 // pred_check_branch
    %72 = sbr.rel (0) target = $region21
  $region20: #{simple_bert_forward.10} parent=0 // pred_region
    _
  $region21: #{simple_bert_forward.10} parent=0 // pred_fallthru
    _
  // Predicated region
  $region22: #{simple_bert_forward.10} parent=0 // pred_check
    _
  $region23: #{simple_bert_forward.10} parent=0 // pred_check_branch
    %74 = sbr.rel (0) target = $region25
  $region24: #{simple_bert_forward.10} parent=0 // pred_region
    _
  $region25: #{simple_bert_forward.10} parent=0 // pred_fallthru
    _

// kernel: simple_bert_forward.12
$region0: #{simple_bert_forward.12}
  #allocation0 [shape = 'u32[]', space=smem, size = 0x4, offset = 0x4, fixed_abs, tag = 'smem constant byte address 0x4 - core index']
  #allocation1 [shape = 'u32[144,128]{1,0:T(1,128)}', space=vmem, size = 0x12000, scoped, tag = 'internal scratch']
  %s0 = inlined_call_operand.vmem [shape: f32[16,32], index: 0, kind: input, shape index: {}]
  %s1 = inlined_call_operand.vmem [shape: bf16[32,32], index: 1, kind: input, shape index: {}]
  %s2 = inlined_call_operand.vmem [shape: f32[1,32], index: 2, kind: input, shape index: {}]
  %s3 = inlined_call_operand.vmem [shape: f32[16,32], index: 3, kind: input, shape index: {}]
  %s4 = inlined_call_operand.vmem [shape: f32[1,32], index: 4, kind: input, shape index: {}]
  %s5 = inlined_call_operand.vmem [shape: f32[1,32], index: 5, kind: input, shape index: {}]
  %s6 = inlined_call_operand.vmem [shape: f32[16,32], index: 6, kind: output, shape index: {}]
  %s7 = sld [smem:[#allocation0]]
  $region34: #{simple_bert_forward.12} parent=0
    _
  %s9 = ssub.s32 1, %s7
  %s10 = scalar_select 0, %s9, %s7
  // Predicated region
  $region2: #{simple_bert_forward.12} parent=0 // pred_check
    _
  $region3: #{simple_bert_forward.12} parent=0 // pred_check_branch
    %12 = sbr.rel (0) target = $region5
  $region4: #{simple_bert_forward.12} parent=0 // pred_region
    _
  $region5: #{simple_bert_forward.12} parent=0 // pred_fallthru
    _
  // Predicated region
  $region6: #{simple_bert_forward.12} parent=0 // pred_check
    _
  $region7: #{simple_bert_forward.12} parent=0 // pred_check_branch
    %14 = sbr.rel (0) target = $region9
  $region8: #{simple_bert_forward.12} parent=0 // pred_region
    _
  $region9: #{simple_bert_forward.12} parent=0 // pred_fallthru
    _
  // Predicated region
  $region10: #{simple_bert_forward.12} parent=0 // pred_check
    _
  $region11: #{simple_bert_forward.12} parent=0 // pred_check_branch
    %16 = sbr.rel (0) target = $region13
  $region12: #{simple_bert_forward.12} parent=0 // pred_region
    _
  $region13: #{simple_bert_forward.12} parent=0 // pred_fallthru
    _
  // Predicated region
  $region14: #{simple_bert_forward.12} parent=0 // pred_check
    _
  $region15: #{simple_bert_forward.12} parent=0 // pred_check_branch
    %18 = sbr.rel (0) target = $region17
  $region16: #{simple_bert_forward.12} parent=0 // pred_region
    _
  $region17: #{simple_bert_forward.12} parent=0 // pred_fallthru
    _
  // Predicated region
  $region18: #{simple_bert_forward.12} parent=0 // pred_check
    _
  $region19: #{simple_bert_forward.12} parent=0 // pred_check_branch
    %20 = sbr.rel (0) target = $region21
  $region20: #{simple_bert_forward.12} parent=0 // pred_region
    _
  $region21: #{simple_bert_forward.12} parent=0 // pred_fallthru
    _
  // Predicated region
  $region22: #{simple_bert_forward.12} parent=0 // pred_check
    _
  $region23: #{simple_bert_forward.12} parent=0 // pred_check_branch
    %22 = sbr.rel (0) target = $region25
  $region24: #{simple_bert_forward.12} parent=0 // pred_region
    _
  $region25: #{simple_bert_forward.12} parent=0 // pred_fallthru
    _
  %v24 = vld [vmem:[%s0] sm:$0xff]
  %v25 = vld [vmem:[%s0 + $0x8] sm:$0xff]
  %v26 = vpack.c.bf16 %v25, %v24
  %v27 = vld [vmem:[%s1] sm:$0xf]
  %v28 = vld [vmem:[%s1 + $0x4] sm:$0xf]
  %v29 = vld [vmem:[%s1 + $0x8] sm:$0xf]
  %v30 = vld [vmem:[%s1 + $0xc] sm:$0xf]
  %v31 = vld [vmem:[%s2] sm:$0x1]
  %v33 = vlaneseq
  %v34 = vshrl.u32 %v33, 7
  %v35 = vsub.s32 0, %v34
  %v36 = vrot.slane %v31, %v35
  %v42 = vunpack.c.l.b16 %v27
  %v43 = vunpack.c.l.b16 %v28
  %v44 = vunpack.c.l.b16 %v29
  %v45 = vunpack.c.l.b16 %v30
  %v46 = vpack.c.b16 %v43, %v42
  %v47 = vpack.c.b16 %v45, %v44
  %vm50 = vcmask 261120
  %v52 = vsel %vm50, %v26, 0
  %54 = vmatprep.subr.bf16.mxu0 0
  %55 = vmatpush1.bf16.msra.mxu0 %v46
  %56 = vmatprep.subr.bf16.mxu0 0
  %57 = vmatpush1.bf16.msra.mxu0 %v47
  %58 = vmatprep.subr.bf16.mxu0 0
  %59 = vmatpush1.bf16.msra.mxu0 0
  %60 = vmatprep.subr.bf16.mxu0 0
  %61 = vmatpush1.bf16.msra.mxu0 0
  %62 = vmatprep.subr.bf16.mxu0 0
  %63 = vmatpush1.bf16.msra.mxu0 0
  %64 = vmatprep.subr.bf16.mxu0 0
  %65 = vmatpush1.bf16.msra.mxu0 0
  %66 = vmatprep.subr.bf16.mxu0 0
  %67 = vmatpush1.bf16.msra.mxu0 0
  %68 = vmatprep.subr.bf16.mxu0 0
  %69 = vmatpush1.bf16.msra.mxu0 0
  %70 = vmatprep.subr.bf16.mxu0 0
  %71 = vmatpush1.bf16.msra.mxu0 0
  %72 = vmatprep.subr.bf16.mxu0 0
  %73 = vmatpush1.bf16.msra.mxu0 0
  %74 = vmatprep.subr.bf16.mxu0 0
  %75 = vmatpush1.bf16.msra.mxu0 0
  %76 = vmatprep.subr.bf16.mxu0 0
  %77 = vmatpush1.bf16.msra.mxu0 0
  %78 = vmatprep.subr.bf16.mxu0 0
  %79 = vmatpush1.bf16.msra.mxu0 0
  %80 = vmatprep.subr.bf16.mxu0 0
  %81 = vmatpush1.bf16.msra.mxu0 0
  %82 = vmatprep.subr.bf16.mxu0 0
  %83 = vmatpush1.bf16.msra.mxu0 0
  %84 = vmatprep.subr.bf16.mxu0 0
  %85 = vmatpush1.bf16.msra.mxu0 0
  %86 = vmatprep.mubr.bf16.mxu0 0
  %87 = vmatmul.mubr.bf16.gmra.mrb[0].mxu0 %v52
  %v88 = vpop.f32.mrb[0].mxu0
  %v89 = vadd.f32 %v36, %v88
  %v90 = vpop.f32.mrb[0].mxu0
  %v91 = vpop.f32.mrb[0].mxu0
  %v92 = vadd.f32 %v36, %v91
  %v93 = vpop.f32.mrb[0].mxu0
  %94 = vdwg.mxu0
  %v95 = vld [vmem:[%s3] sm:$0xff]
  %v96 = vld [vmem:[%s3 + $0x8] sm:$0xff]
  %v97 = vadd.f32 %v89, %v95
  %v98 = vadd.f32 %v92, %v96
  %v99 = vsel %vm50, %v97, 0.0
  %100 = vadd.xlane.f32.xlu0 %v99
  %v101 = vpop.xlane.xlu0 %100
  %v102 = vsel %vm50, %v98, 0.0
  %103 = vadd.xlane.f32.xlu0 %v102
  %v104 = vpop.xlane.xlu0 %103
  %v105 = vrcp.pop 32.0
  %v106 = vmul.f32 %v101, %v105
  %v107 = vmul.f32 %v104, %v105
  %v108 = vsub.f32 %v97, %v106
  %v109 = vsub.f32 %v98, %v107
  %v110 = vmul.f32 %v108, %v108
  %v111 = vmul.f32 %v109, %v109
  %v112 = vsel %vm50, %v110, 0.0
  %113 = vadd.xlane.f32.xlu0 %v112
  %v114 = vpop.xlane.xlu0 %113
  %v115 = vsel %vm50, %v111, 0.0
  %116 = vadd.xlane.f32.xlu0 %v115
  %v117 = vpop.xlane.xlu0 %116
  %v118 = vmul.f32 %v114, %v105
  %v119 = vmul.f32 %v117, %v105
  %v120 = vadd.f32 %v118, 1e-12
  %v121 = vadd.f32 %v119, 1e-12
  %v122 = vrsqrt.pop %v120
  %v123 = vrsqrt.pop %v121
  %v124 = vmul.f32 %v108, %v122
  %v125 = vmul.f32 %v109, %v123
  %v126 = vld [vmem:[%s4] sm:$0x1]
  %v128 = vlaneseq
  %v129 = vshrl.u32 %v128, 7
  %v130 = vsub.s32 0, %v129
  %v131 = vrot.slane %v126, %v130
  %v133 = vmul.f32 %v124, %v131
  %v134 = vmul.f32 %v125, %v131
  %v135 = vld [vmem:[%s5] sm:$0x1]
  %v137 = vlaneseq
  %v138 = vshrl.u32 %v137, 7
  %v139 = vsub.s32 0, %v138
  %v140 = vrot.slane %v135, %v139
  %v142 = vadd.f32 %v133, %v140
  %v143 = vadd.f32 %v134, %v140
  %144 = vst.msk [vmem:[%s6] sm:$0xff] %vm50, %v142
  %145 = vst.msk [vmem:[%s6 + $0x8] sm:$0xff] %vm50, %v143
  // Predicated region
  $region26: #{simple_bert_forward.12} parent=0 // pred_check
    _
  $region27: #{simple_bert_forward.12} parent=0 // pred_check_branch
    %147 = sbr.rel (0) target = $region29
  $region28: #{simple_bert_forward.12} parent=0 // pred_region
    _
  $region29: #{simple_bert_forward.12} parent=0 // pred_fallthru
    _
  // Predicated region
  $region30: #{simple_bert_forward.12} parent=0 // pred_check
    _
  $region31: #{simple_bert_forward.12} parent=0 // pred_check_branch
    %149 = sbr.rel (0) target = $region33
  $region32: #{simple_bert_forward.12} parent=0 // pred_region
    _
  $region33: #{simple_bert_forward.12} parent=0 // pred_fallthru
    _

// kernel: simple_bert_forward.13
$region0: #{simple_bert_forward.13}
  #allocation0 [shape = 'u32[]', space=smem, size = 0x4, offset = 0x4, fixed_abs, tag = 'smem constant byte address 0x4 - core index']
  #allocation1 [shape = 'u32[144,128]{1,0:T(1,128)}', space=vmem, size = 0x12000, scoped, tag = 'internal scratch']
  %s0 = inlined_call_operand.vmem [shape: f32[16,32], index: 0, kind: input, shape index: {}]
  %s1 = inlined_call_operand.vmem [shape: bf16[32,64], index: 1, kind: input, shape index: {}]
  %s2 = inlined_call_operand.vmem [shape: f32[1,64], index: 2, kind: input, shape index: {}]
  %s3 = inlined_call_operand.vmem [shape: f32[16,64], index: 3, kind: output, shape index: {}]
  %s4 = sld [smem:[#allocation0]]
  $region22: #{simple_bert_forward.13} parent=0
    _
  %s6 = ssub.s32 1, %s4
  %s7 = scalar_select 0, %s6, %s4
  // Predicated region
  $region2: #{simple_bert_forward.13} parent=0 // pred_check
    _
  $region3: #{simple_bert_forward.13} parent=0 // pred_check_branch
    %9 = sbr.rel (0) target = $region5
  $region4: #{simple_bert_forward.13} parent=0 // pred_region
    _
  $region5: #{simple_bert_forward.13} parent=0 // pred_fallthru
    _
  // Predicated region
  $region6: #{simple_bert_forward.13} parent=0 // pred_check
    _
  $region7: #{simple_bert_forward.13} parent=0 // pred_check_branch
    %11 = sbr.rel (0) target = $region9
  $region8: #{simple_bert_forward.13} parent=0 // pred_region
    _
  $region9: #{simple_bert_forward.13} parent=0 // pred_fallthru
    _
  // Predicated region
  $region10: #{simple_bert_forward.13} parent=0 // pred_check
    _
  $region11: #{simple_bert_forward.13} parent=0 // pred_check_branch
    %13 = sbr.rel (0) target = $region13
  $region12: #{simple_bert_forward.13} parent=0 // pred_region
    _
  $region13: #{simple_bert_forward.13} parent=0 // pred_fallthru
    _
  %v15 = vld [vmem:[%s0] sm:$0xff]
  %v16 = vld [vmem:[%s0 + $0x8] sm:$0xff]
  %v17 = vpack.c.bf16 %v16, %v15
  %v18 = vld [vmem:[%s1] sm:$0xf]
  %v19 = vld [vmem:[%s1 + $0x4] sm:$0xf]
  %v20 = vld [vmem:[%s1 + $0x8] sm:$0xf]
  %v21 = vld [vmem:[%s1 + $0xc] sm:$0xf]
  %v22 = vld [vmem:[%s2] sm:$0x1]
  %v24 = vlaneseq
  %v25 = vshrl.u32 %v24, 7
  %v26 = vsub.s32 0, %v25
  %v27 = vrot.slane %v22, %v26
  %v33 = vunpack.c.l.b16 %v18
  %v34 = vunpack.c.l.b16 %v19
  %v35 = vunpack.c.l.b16 %v20
  %v36 = vunpack.c.l.b16 %v21
  %v37 = vpack.c.b16 %v34, %v33
  %v38 = vpack.c.b16 %v36, %v35
  %vm41 = vcmask 261120
  %v43 = vsel %vm41, %v17, 0
  %45 = vmatprep.subr.bf16.mxu0 0
  %46 = vmatpush1.bf16.msra.mxu0 %v37
  %47 = vmatprep.subr.bf16.mxu0 0
  %48 = vmatpush1.bf16.msra.mxu0 %v38
  %49 = vmatprep.subr.bf16.mxu0 0
  %50 = vmatpush1.bf16.msra.mxu0 0
  %51 = vmatprep.subr.bf16.mxu0 0
  %52 = vmatpush1.bf16.msra.mxu0 0
  %53 = vmatprep.subr.bf16.mxu0 0
  %54 = vmatpush1.bf16.msra.mxu0 0
  %55 = vmatprep.subr.bf16.mxu0 0
  %56 = vmatpush1.bf16.msra.mxu0 0
  %57 = vmatprep.subr.bf16.mxu0 0
  %58 = vmatpush1.bf16.msra.mxu0 0
  %59 = vmatprep.subr.bf16.mxu0 0
  %60 = vmatpush1.bf16.msra.mxu0 0
  %61 = vmatprep.subr.bf16.mxu0 0
  %62 = vmatpush1.bf16.msra.mxu0 0
  %63 = vmatprep.subr.bf16.mxu0 0
  %64 = vmatpush1.bf16.msra.mxu0 0
  %65 = vmatprep.subr.bf16.mxu0 0
  %66 = vmatpush1.bf16.msra.mxu0 0
  %67 = vmatprep.subr.bf16.mxu0 0
  %68 = vmatpush1.bf16.msra.mxu0 0
  %69 = vmatprep.subr.bf16.mxu0 0
  %70 = vmatpush1.bf16.msra.mxu0 0
  %71 = vmatprep.subr.bf16.mxu0 0
  %72 = vmatpush1.bf16.msra.mxu0 0
  %73 = vmatprep.subr.bf16.mxu0 0
  %74 = vmatpush1.bf16.msra.mxu0 0
  %75 = vmatprep.subr.bf16.mxu0 0
  %76 = vmatpush1.bf16.msra.mxu0 0
  %77 = vmatprep.mubr.bf16.mxu0 0
  %78 = vmatmul.mubr.bf16.gmra.mrb[0].mxu0 %v43
  %v79 = vpop.f32.mrb[0].mxu0
  %v80 = vadd.f32 %v27, %v79
  %v81 = vpop.f32.mrb[0].mxu0
  %v82 = vpop.f32.mrb[0].mxu0
  %v83 = vadd.f32 %v27, %v82
  %v84 = vpop.f32.mrb[0].mxu0
  %85 = vdwg.mxu0
  %vm86 = vcmask 523264
  %87 = vst.msk [vmem:[%s3] sm:$0xff] %vm86, %v80
  %88 = vst.msk [vmem:[%s3 + $0x8] sm:$0xff] %vm86, %v83
  // Predicated region
  $region14: #{simple_bert_forward.13} parent=0 // pred_check
    _
  $region15: #{simple_bert_forward.13} parent=0 // pred_check_branch
    %90 = sbr.rel (0) target = $region17
  $region16: #{simple_bert_forward.13} parent=0 // pred_region
    _
  $region17: #{simple_bert_forward.13} parent=0 // pred_fallthru
    _
  // Predicated region
  $region18: #{simple_bert_forward.13} parent=0 // pred_check
    _
  $region19: #{simple_bert_forward.13} parent=0 // pred_check_branch
    %92 = sbr.rel (0) target = $region21
  $region20: #{simple_bert_forward.13} parent=0 // pred_region
    _
  $region21: #{simple_bert_forward.13} parent=0 // pred_fallthru
    _

// kernel: simple_bert_forward.11
$region0: #{simple_bert_forward.11}
  #allocation0 [shape = 'u32[]', space=smem, size = 0x4, offset = 0x4, fixed_abs, tag = 'smem constant byte address 0x4 - core index']
  #allocation1 [shape = 'u32[144,128]{1,0:T(1,128)}', space=vmem, size = 0x12000, scoped, tag = 'internal scratch']
  #allocation2 [shape = 'f32[8,96]{1,0:T(8,128)}', space=vmem, size = 0x1000, scoped, tag = 'scratch operand']
  %s0 = inlined_call_operand.vmem [shape: f32[2,8,32], index: 0, kind: input, shape index: {}]
  %s1 = inlined_call_operand.vmem [shape: bf16[32,96], index: 1, kind: input, shape index: {}]
  %s2 = inlined_call_operand.vmem [shape: f32[1,96], index: 2, kind: input, shape index: {}]
  %s3 = inlined_call_operand.vmem [shape: f32[2,1,8], index: 3, kind: input, shape index: {}]
  %s4 = inlined_call_operand.vmem [shape: f32[2,8,32], index: 4, kind: output, shape index: {}]
  %s5 = sld [smem:[#allocation0]]
  $region49: #{simple_bert_forward.11} parent=0
    _
  %s7 = ssub.s32 1, %s5
  %s8 = scalar_select 0, %s7, %s5
  loop: start=0, step=1, limit=4
  $region2: #{simple_bert_forward.11} parent=0 // loop_pre_header
    _
  $region3: #{simple_bert_forward.11} parent=0 // loop_header
    %s10 = sphi 0, %s14
    %p11 = scmp.ge.s32.totalorder %s10, 4
    %s20 = sphi 0, %s22
    %s23 = sphi 0, %s20
    %s24 = sphi 0, %s23
    %s40 = sphi 0, %s24
    %s44 = sphi 0, %s44
    %s46 = sphi 0, %s44
    %s47 = sphi 0, %s46
    %s61 = sphi 0, %s47
    %s65 = sphi 0, %s65
    %s67 = sphi 0, %s65
    %s68 = sphi 0, %s67
    %s82 = sphi 0, %s68
    %s88 = sphi 0, %s90
    %s91 = sphi 0, %s88
    %s92 = sphi 0, %s91
    %s108 = sphi 0, %s92
    %s114 = sphi 0, %s116
    %s117 = sphi 0, %s114
    %s118 = sphi 0, %s117
    %s134 = sphi 0, %s118
  $region4: #{simple_bert_forward.11} parent=0 // loop_header_branch
    %13 = sbr.rel (%p11) target = $region8
  $region5: #{simple_bert_forward.11} parent=0 // loop_body
    %s15 = ssub.s32 %s10, 1
    %s16 = ssub.s32 %s10, 2
    %s17 = sadd.s32 %s10, 1
    %s18 = ssub.s32 %s10, %s17
    %p19 = scmp.eq.s32.totalorder %s18, 0
    %s21 = sadd.s32 %s20, 1
    %s22 = scalar_select %p19, %s20, %s21
    %p25 = pneg %p19
    %p26 = scmp.eq.s32.totalorder %s10, 1
    %p27 = por %p25, %p26
    %p28 = scmp.ne.s32.totalorder %s20, %s23
    %p29 = scmp.eq.s32.totalorder %s10, 0
    %p30 = por %p28, %p29
    %p31 = scmp.ne.s32.totalorder %s20, %s23
    %p32 = scmp.eq.s32.totalorder %s15, 1
    %p33 = por %p31, %p32
    %p34 = scmp.ne.s32.totalorder %s23, %s24
    %p35 = scmp.eq.s32.totalorder %s15, 0
    %p36 = por %p34, %p35
    %p37 = scmp.ne.s32.totalorder %s23, %s24
    %p38 = scmp.eq.s32.totalorder %s16, 1
    %p39 = por %p37, %p38
    %p41 = scmp.ne.s32.totalorder %s24, %s40
    %p42 = scmp.eq.s32.totalorder %s16, 0
    %p43 = por %p41, %p42
    %s45 = sadd.s32 %s44, 1
    %p48 = scmp.eq.s32.totalorder %s10, 1
    %p49 = scmp.ne.s32.totalorder %s44, %s46
    %p50 = scmp.eq.s32.totalorder %s10, 0
    %p51 = por %p49, %p50
    %p52 = scmp.ne.s32.totalorder %s44, %s46
    %p53 = scmp.eq.s32.totalorder %s15, 1
    %p54 = por %p52, %p53
    %p55 = scmp.ne.s32.totalorder %s46, %s47
    %p56 = scmp.eq.s32.totalorder %s15, 0
    %p57 = por %p55, %p56
    %p58 = scmp.ne.s32.totalorder %s46, %s47
    %p59 = scmp.eq.s32.totalorder %s16, 1
    %p60 = por %p58, %p59
    %p62 = scmp.ne.s32.totalorder %s47, %s61
    %p63 = scmp.eq.s32.totalorder %s16, 0
    %p64 = por %p62, %p63
    %s66 = sadd.s32 %s65, 1
    %p69 = scmp.eq.s32.totalorder %s10, 1
    %p70 = scmp.ne.s32.totalorder %s65, %s67
    %p71 = scmp.eq.s32.totalorder %s10, 0
    %p72 = por %p70, %p71
    %p73 = scmp.ne.s32.totalorder %s65, %s67
    %p74 = scmp.eq.s32.totalorder %s15, 1
    %p75 = por %p73, %p74
    %p76 = scmp.ne.s32.totalorder %s67, %s68
    %p77 = scmp.eq.s32.totalorder %s15, 0
    %p78 = por %p76, %p77
    %p79 = scmp.ne.s32.totalorder %s67, %s68
    %p80 = scmp.eq.s32.totalorder %s16, 1
    %p81 = por %p79, %p80
    %p83 = scmp.ne.s32.totalorder %s68, %s82
    %p84 = scmp.eq.s32.totalorder %s16, 0
    %p85 = por %p83, %p84
    %s86 = ssub.s32 %s10, %s17
    %p87 = scmp.eq.s32.totalorder %s86, 0
    %s89 = sadd.s32 %s88, 1
    %s90 = scalar_select %p87, %s88, %s89
    %p93 = pneg %p87
    %p94 = scmp.eq.s32.totalorder %s10, 1
    %p95 = por %p93, %p94
    %p96 = scmp.ne.s32.totalorder %s88, %s91
    %p97 = scmp.eq.s32.totalorder %s10, 0
    %p98 = por %p96, %p97
    %p99 = scmp.ne.s32.totalorder %s88, %s91
    %p100 = scmp.eq.s32.totalorder %s15, 1
    %p101 = por %p99, %p100
    %p102 = scmp.ne.s32.totalorder %s91, %s92
    %p103 = scmp.eq.s32.totalorder %s15, 0
    %p104 = por %p102, %p103
    %p105 = scmp.ne.s32.totalorder %s91, %s92
    %p106 = scmp.eq.s32.totalorder %s16, 1
    %p107 = por %p105, %p106
    %p109 = scmp.ne.s32.totalorder %s92, %s108
    %p110 = scmp.eq.s32.totalorder %s16, 0
    %p111 = por %p109, %p110
    %s112 = ssub.s32 %s10, %s17
    %p113 = scmp.eq.s32.totalorder %s112, 0
    %s115 = sadd.s32 %s114, 1
    %s116 = scalar_select %p113, %s114, %s115
    %p119 = pneg %p113
    %p120 = scmp.eq.s32.totalorder %s10, 1
    %p121 = por %p119, %p120
    %p122 = scmp.ne.s32.totalorder %s114, %s117
    %p123 = scmp.eq.s32.totalorder %s10, 0
    %p124 = por %p122, %p123
    %p125 = scmp.ne.s32.totalorder %s114, %s117
    %p126 = scmp.eq.s32.totalorder %s15, 1
    %p127 = por %p125, %p126
    %p128 = scmp.ne.s32.totalorder %s117, %s118
    %p129 = scmp.eq.s32.totalorder %s15, 0
    %p130 = por %p128, %p129
    %p131 = scmp.ne.s32.totalorder %s117, %s118
    %p132 = scmp.eq.s32.totalorder %s16, 1
    %p133 = por %p131, %p132
    %p135 = scmp.ne.s32.totalorder %s118, %s134
    %p136 = scmp.eq.s32.totalorder %s16, 0
    %p137 = por %p135, %p136
    %p138 = scmp.le.s32.totalorder 1, %s10
    %p139 = scmp.lt.s32.totalorder %s10, 3
    %p140 = pnand %p138, %p139
    %p141 = pneg %p140
    // Predicated region
    $region9: #{simple_bert_forward.11} parent=5 // pred_check
      _
    $region10: #{simple_bert_forward.11} parent=5 // pred_check_branch
      %143 = sbr.rel (%p140) target = $region12
    $region11: #{simple_bert_forward.11} parent=5 // pred_region
      %s144 = ssub.s32 %s10, 1
      // Predicated region
      $region13: #{simple_bert_forward.11} parent=11 // pred_check
        %p145 = pneg %p57
      $region14: #{simple_bert_forward.11} parent=11 // pred_check_branch
        %147 = sbr.rel (%p145) target = $region16
      $region15: #{simple_bert_forward.11} parent=11 // pred_region
        _
      $region16: #{simple_bert_forward.11} parent=11 // pred_fallthru
        _
      // Predicated region
      $region17: #{simple_bert_forward.11} parent=11 // pred_check
        %p148 = pneg %p78
      $region18: #{simple_bert_forward.11} parent=11 // pred_check_branch
        %150 = sbr.rel (%p148) target = $region20
      $region19: #{simple_bert_forward.11} parent=11 // pred_region
        _
      $region20: #{simple_bert_forward.11} parent=11 // pred_fallthru
        _
    $region12: #{simple_bert_forward.11} parent=5 // pred_fallthru
      _
    %p151 = scmp.lt.s32.totalorder %s10, 2
    // Predicated region
    $region21: #{simple_bert_forward.11} parent=5 // pred_check
      %p152 = pneg %p151
    $region22: #{simple_bert_forward.11} parent=5 // pred_check_branch
      %154 = sbr.rel (%p152) target = $region24
    $region23: #{simple_bert_forward.11} parent=5 // pred_region
      // Predicated region
      $region25: #{simple_bert_forward.11} parent=23 // pred_check
        %p155 = pneg %p30
      $region26: #{simple_bert_forward.11} parent=23 // pred_check_branch
        %157 = sbr.rel (%p155) target = $region28
      $region27: #{simple_bert_forward.11} parent=23 // pred_region
        %p158 = scmp.lt.s32.totalorder %s10, 1
        %s159 = scalar_select %p158, %s10, 1
        %s160 = smul.addr %s159, 8
        %s161 = scalar_lea.vmem %s0, %s160
      $region28: #{simple_bert_forward.11} parent=23 // pred_fallthru
        _
      // Predicated region
      $region29: #{simple_bert_forward.11} parent=23 // pred_check
        %p162 = pneg %p98
      $region30: #{simple_bert_forward.11} parent=23 // pred_check_branch
        %164 = sbr.rel (%p162) target = $region32
      $region31: #{simple_bert_forward.11} parent=23 // pred_region
        %p165 = scmp.lt.s32.totalorder %s10, 1
        %s166 = scalar_select %p165, %s10, 1
        %s167 = scalar_lea.vmem %s3, %s166
      $region32: #{simple_bert_forward.11} parent=23 // pred_fallthru
        _
    $region24: #{simple_bert_forward.11} parent=5 // pred_fallthru
      _
    %p168 = scmp.le.s32.totalorder 1, %s10
    %p169 = scmp.lt.s32.totalorder %s10, 3
    %p170 = pnand %p168, %p169
    %p171 = pneg %p170
    // Predicated region
    $region33: #{simple_bert_forward.11} parent=5 // pred_check
      _
    $region34: #{simple_bert_forward.11} parent=5 // pred_check_branch
      %173 = sbr.rel (%p170) target = $region36
    $region35: #{simple_bert_forward.11} parent=5 // pred_region
      %s174 = ssub.s32 %s10, 1
      %p175 = scmp.lt.s32.totalorder %s15, 1
      %s176 = scalar_select %p175, %s15, 1
      %s177 = smul.addr %s176, 8
      %s178 = scalar_lea.vmem %s0, %s177
      %p179 = pneg %p36
      %p180 = pneg %p33
      %p181 = pneg %p57
      %p182 = pneg %p54
      %p183 = pneg %p78
      %p184 = pneg %p75
      %p185 = scmp.lt.s32.totalorder %s15, 1
      %s186 = scalar_select %p185, %s15, 1
      %s187 = scalar_lea.vmem %s3, %s186
      %p188 = pneg %p104
      %p189 = pneg %p101
      %p190 = pneg %p130
      %p191 = pneg %p127
      %p192 = scmp.lt.s32.totalorder %s15, 1
      %s193 = scalar_select %p192, %s15, 1
      %s194 = smul.addr %s193, 8
      %s195 = scalar_lea.vmem %s4, %s194
      %p196 = scmp.lt.s32.totalorder %s15, 1
      %s197 = scalar_select %p196, %s15, 1
      %s198 = smul.addr %s197, 8
      %s199 = scalar_lea.vmem %s0, %s198
      %p200 = scmp.lt.s32.totalorder %s15, 1
      %s201 = scalar_select %p200, %s15, 1
      %s202 = scalar_lea.vmem %s3, %s201
      %p203 = scmp.lt.s32.totalorder %s15, 1
      %s204 = scalar_select %p203, %s15, 1
      %s205 = smul.addr %s204, 8
      %s206 = scalar_lea.vmem %s4, %s205
      %v208 = vld [vmem:[%s199] sm:$0xff]
      %v209 = vpack.c.bf16 %v208, %v208
      %v210 = vld [vmem:[%s1] sm:$0xf]
      %v211 = vld [vmem:[%s1 + $0x4] sm:$0xf]
      %v212 = vld [vmem:[%s1 + $0x8] sm:$0xf]
      %v213 = vld [vmem:[%s1 + $0xc] sm:$0xf]
      %v214 = vld [vmem:[%s2] sm:$0x1]
      %v216 = vlaneseq
      %v217 = vshrl.u32 %v216, 7
      %v218 = vsub.s32 0, %v217
      %v219 = vrot.slane %v214, %v218
      %v225 = vunpack.c.l.b16 %v210
      %v226 = vunpack.c.l.b16 %v211
      %v227 = vunpack.c.l.b16 %v212
      %v228 = vunpack.c.l.b16 %v213
      %v229 = vpack.c.b16 %v226, %v225
      %v230 = vpack.c.b16 %v228, %v227
      %vm233 = vcmask 261120
      %v235 = vsel %vm233, %v209, 0
      %237 = vmatprep.subr.bf16.mxu0 0
      %238 = vmatpush1.bf16.msra.mxu0 %v229
      %239 = vmatprep.subr.bf16.mxu0 0
      %240 = vmatpush1.bf16.msra.mxu0 %v230
      %241 = vmatprep.subr.bf16.mxu0 0
      %242 = vmatpush1.bf16.msra.mxu0 0
      %243 = vmatprep.subr.bf16.mxu0 0
      %244 = vmatpush1.bf16.msra.mxu0 0
      %245 = vmatprep.subr.bf16.mxu0 0
      %246 = vmatpush1.bf16.msra.mxu0 0
      %247 = vmatprep.subr.bf16.mxu0 0
      %248 = vmatpush1.bf16.msra.mxu0 0
      %249 = vmatprep.subr.bf16.mxu0 0
      %250 = vmatpush1.bf16.msra.mxu0 0
      %251 = vmatprep.subr.bf16.mxu0 0
      %252 = vmatpush1.bf16.msra.mxu0 0
      %253 = vmatprep.subr.bf16.mxu0 0
      %254 = vmatpush1.bf16.msra.mxu0 0
      %255 = vmatprep.subr.bf16.mxu0 0
      %256 = vmatpush1.bf16.msra.mxu0 0
      %257 = vmatprep.subr.bf16.mxu0 0
      %258 = vmatpush1.bf16.msra.mxu0 0
      %259 = vmatprep.subr.bf16.mxu0 0
      %260 = vmatpush1.bf16.msra.mxu0 0
      %261 = vmatprep.subr.bf16.mxu0 0
      %262 = vmatpush1.bf16.msra.mxu0 0
      %263 = vmatprep.subr.bf16.mxu0 0
      %264 = vmatpush1.bf16.msra.mxu0 0
      %265 = vmatprep.subr.bf16.mxu0 0
      %266 = vmatpush1.bf16.msra.mxu0 0
      %267 = vmatprep.subr.bf16.mxu0 0
      %268 = vmatpush1.bf16.msra.mxu0 0
      %269 = vmatprep.mubr.bf16.mxu0 0
      %270 = vmatmul.mubr.bf16.gmra.mrb[0].mxu0 %v235
      %v271 = vpop.f32.mrb[0].mxu0
      %v272 = vadd.f32 %v219, %v271
      %v273 = vpop.f32.mrb[0].mxu0
      %v274 = vpop.f32.mrb[0].mxu0
      %v275 = vpop.f32.mrb[0].mxu0
      %276 = vdwg.mxu0
      %vm277 = vcmask 785408
      %278 = vst.msk [vmem:[#allocation2] sm:$0xff] %vm277, %v272
      %v279 = vld [vmem:[%s202] sm:$0x1]
      %v280 = vld [vmem:[#allocation2] sm:$0xff]
      %v281 = vmul.f32 %v280, 0.35355338
      %v282 = vpack.c.bf16 %v281, %v281
      %v283 = vpack.c.bf16 %v280, %v280
      %v285 = vlaneseq
      %v286 = vshrl.u32 %v285, 7
      %v287 = vsub.s32 0, %v286
      %v288 = vrot.slane %v279, %v287
      %291 = vrot.lane.b32.xlu0 %v283, 96
      %v292 = vpop.permute.xlu0 %291
      %vm293 = vcmask 64512
      %v295 = vsel %vm293, %v282, 0
      %v298 = vsel %vm293, %v292, 0
      %300 = vmatprep.subr.bf16.mxu0 0
      %301 = vmatpush1.bf16.xpose.msra.mxu0 %v298
      %302 = vmatprep.subr.bf16.mxu0 0
      %303 = vmatpush1.bf16.xpose.msra.mxu0 0
      %304 = vmatprep.subr.bf16.mxu0 0
      %305 = vmatpush1.bf16.xpose.msra.mxu0 0
      %306 = vmatprep.subr.bf16.mxu0 0
      %307 = vmatpush1.bf16.xpose.msra.mxu0 0
      %308 = vmatprep.subr.bf16.mxu0 0
      %309 = vmatpush1.bf16.xpose.msra.mxu0 0
      %310 = vmatprep.subr.bf16.mxu0 0
      %311 = vmatpush1.bf16.xpose.msra.mxu0 0
      %312 = vmatprep.subr.bf16.mxu0 0
      %313 = vmatpush1.bf16.xpose.msra.mxu0 0
      %314 = vmatprep.subr.bf16.mxu0 0
      %315 = vmatpush1.bf16.xpose.msra.mxu0 0
      %316 = vmatprep.subr.bf16.mxu0 0
      %317 = vmatpush1.bf16.xpose.msra.mxu0 0
      %318 = vmatprep.subr.bf16.mxu0 0
      %319 = vmatpush1.bf16.xpose.msra.mxu0 0
      %320 = vmatprep.subr.bf16.mxu0 0
      %321 = vmatpush1.bf16.xpose.msra.mxu0 0
      %322 = vmatprep.subr.bf16.mxu0 0
      %323 = vmatpush1.bf16.xpose.msra.mxu0 0
      %324 = vmatprep.subr.bf16.mxu0 0
      %325 = vmatpush1.bf16.xpose.msra.mxu0 0
      %326 = vmatprep.subr.bf16.mxu0 0
      %327 = vmatpush1.bf16.xpose.msra.mxu0 0
      %328 = vmatprep.subr.bf16.mxu0 0
      %329 = vmatpush1.bf16.xpose.msra.mxu0 0
      %330 = vmatprep.subr.bf16.mxu0 0
      %331 = vmatpush1.bf16.xpose.msra.mxu0 0
      %332 = vmatprep.mubr.bf16.mxu0 0
      %333 = vmatmul.mubr.bf16.gmra.mrb[0].mxu0 %v295
      %v334 = vpop.f32.mrb[0].mxu0
      %v335 = vadd.f32 %v288, %v334
      %v336 = vpop.f32.mrb[0].mxu0
      %v337 = vpop.f32.mrb[0].mxu0
      %v338 = vpop.f32.mrb[0].mxu0
      %339 = vdwg.mxu0
      %v340 = vsel %vm293, %v335, -inf
      %341 = vmax.xlane.f32.xlu0 %v340
      %v342 = vpop.xlane.xlu0 %341
      %v343 = vsub.f32 %v335, %v342
      %v344 = vmul.f32 %v343, 1.442695
      %v345 = vpow.pop %v344
      %v346 = vsel %vm293, %v345, 0.0
      %347 = vadd.xlane.f32.xlu0 %v346
      %v348 = vpop.xlane.xlu0 %347
      %v349 = vrcp.pop %v348
      %v350 = vmul.f32 %v345, %v349
      %v351 = vpack.c.bf16 %v350, %v350
      %352 = vrot.lane.b32.xlu0 %v283, 64
      %v353 = vpop.permute.xlu0 %352
      %v355 = vsel %vm293, %v351, 0
      %vm357 = vcmask 1043456
      %v359 = vsel %vm357, %v353, 0
      %361 = vmatprep.subr.bf16.mxu0 0
      %362 = vmatpush1.bf16.msra.mxu0 %v359
      %363 = vmatprep.subr.bf16.mxu0 0
      %364 = vmatpush1.bf16.msra.mxu0 0
      %365 = vmatprep.subr.bf16.mxu0 0
      %366 = vmatpush1.bf16.msra.mxu0 0
      %367 = vmatprep.subr.bf16.mxu0 0
      %368 = vmatpush1.bf16.msra.mxu0 0
      %369 = vmatprep.subr.bf16.mxu0 0
      %370 = vmatpush1.bf16.msra.mxu0 0
      %371 = vmatprep.subr.bf16.mxu0 0
      %372 = vmatpush1.bf16.msra.mxu0 0
      %373 = vmatprep.subr.bf16.mxu0 0
      %374 = vmatpush1.bf16.msra.mxu0 0
      %375 = vmatprep.subr.bf16.mxu0 0
      %376 = vmatpush1.bf16.msra.mxu0 0
      %377 = vmatprep.subr.bf16.mxu0 0
      %378 = vmatpush1.bf16.msra.mxu0 0
      %379 = vmatprep.subr.bf16.mxu0 0
      %380 = vmatpush1.bf16.msra.mxu0 0
      %381 = vmatprep.subr.bf16.mxu0 0
      %382 = vmatpush1.bf16.msra.mxu0 0
      %383 = vmatprep.subr.bf16.mxu0 0
      %384 = vmatpush1.bf16.msra.mxu0 0
      %385 = vmatprep.subr.bf16.mxu0 0
      %386 = vmatpush1.bf16.msra.mxu0 0
      %387 = vmatprep.subr.bf16.mxu0 0
      %388 = vmatpush1.bf16.msra.mxu0 0
      %389 = vmatprep.subr.bf16.mxu0 0
      %390 = vmatpush1.bf16.msra.mxu0 0
      %391 = vmatprep.subr.bf16.mxu0 0
      %392 = vmatpush1.bf16.msra.mxu0 0
      %393 = vmatprep.mubr.bf16.mxu0 0
      %394 = vmatmul.mubr.bf16.gmra.mrb[0].mxu0 %v355
      %v395 = vpop.f32.mrb[0].mxu0
      %v396 = vadd.f32 0.0, %v395
      %v397 = vpop.f32.mrb[0].mxu0
      %v398 = vpop.f32.mrb[0].mxu0
      %v399 = vpop.f32.mrb[0].mxu0
      %400 = vdwg.mxu0
      %402 = vrot.lane.b32.xlu0 %v282, 120
      %v403 = vpop.permute.xlu0 %402
      %404 = vrot.lane.b32.xlu0 %v283, 88
      %v405 = vpop.permute.xlu0 %404
      %v407 = vsel %vm293, %v403, 0
      %v410 = vsel %vm293, %v405, 0
      %412 = vmatprep.subr.bf16.mxu0 0
      %413 = vmatpush1.bf16.xpose.msra.mxu0 %v410
      %414 = vmatprep.subr.bf16.mxu0 0
      %415 = vmatpush1.bf16.xpose.msra.mxu0 0
      %416 = vmatprep.subr.bf16.mxu0 0
      %417 = vmatpush1.bf16.xpose.msra.mxu0 0
      %418 = vmatprep.subr.bf16.mxu0 0
      %419 = vmatpush1.bf16.xpose.msra.mxu0 0
      %420 = vmatprep.subr.bf16.mxu0 0
      %421 = vmatpush1.bf16.xpose.msra.mxu0 0
      %422 = vmatprep.subr.bf16.mxu0 0
      %423 = vmatpush1.bf16.xpose.msra.mxu0 0
      %424 = vmatprep.subr.bf16.mxu0 0
      %425 = vmatpush1.bf16.xpose.msra.mxu0 0
      %426 = vmatprep.subr.bf16.mxu0 0
      %427 = vmatpush1.bf16.xpose.msra.mxu0 0
      %428 = vmatprep.subr.bf16.mxu0 0
      %429 = vmatpush1.bf16.xpose.msra.mxu0 0
      %430 = vmatprep.subr.bf16.mxu0 0
      %431 = vmatpush1.bf16.xpose.msra.mxu0 0
      %432 = vmatprep.subr.bf16.mxu0 0
      %433 = vmatpush1.bf16.xpose.msra.mxu0 0
      %434 = vmatprep.subr.bf16.mxu0 0
      %435 = vmatpush1.bf16.xpose.msra.mxu0 0
      %436 = vmatprep.subr.bf16.mxu0 0
      %437 = vmatpush1.bf16.xpose.msra.mxu0 0
      %438 = vmatprep.subr.bf16.mxu0 0
      %439 = vmatpush1.bf16.xpose.msra.mxu0 0
      %440 = vmatprep.subr.bf16.mxu0 0
      %441 = vmatpush1.bf16.xpose.msra.mxu0 0
      %442 = vmatprep.subr.bf16.mxu0 0
      %443 = vmatpush1.bf16.xpose.msra.mxu0 0
      %444 = vmatprep.mubr.bf16.mxu0 0
      %445 = vmatmul.mubr.bf16.gmra.mrb[0].mxu0 %v407
      %v446 = vpop.f32.mrb[0].mxu0
      %v447 = vadd.f32 %v288, %v446
      %v448 = vpop.f32.mrb[0].mxu0
      %v449 = vpop.f32.mrb[0].mxu0
      %v450 = vpop.f32.mrb[0].mxu0
      %451 = vdwg.mxu0
      %v452 = vsel %vm293, %v447, -inf
      %453 = vmax.xlane.f32.xlu0 %v452
      %v454 = vpop.xlane.xlu0 %453
      %v455 = vsub.f32 %v447, %v454
      %v456 = vmul.f32 %v455, 1.442695
      %v457 = vpow.pop %v456
      %v458 = vsel %vm293, %v457, 0.0
      %459 = vadd.xlane.f32.xlu0 %v458
      %v460 = vpop.xlane.xlu0 %459
      %v461 = vrcp.pop %v460
      %v462 = vmul.f32 %v457, %v461
      %v463 = vpack.c.bf16 %v462, %v462
      %464 = vrot.lane.b32.xlu0 %v283, 56
      %v465 = vpop.permute.xlu0 %464
      %v467 = vsel %vm293, %v463, 0
      %v470 = vsel %vm357, %v465, 0
      %472 = vmatprep.subr.bf16.mxu0 0
      %473 = vmatpush1.bf16.msra.mxu0 %v470
      %474 = vmatprep.subr.bf16.mxu0 0
      %475 = vmatpush1.bf16.msra.mxu0 0
      %476 = vmatprep.subr.bf16.mxu0 0
      %477 = vmatpush1.bf16.msra.mxu0 0
      %478 = vmatprep.subr.bf16.mxu0 0
      %479 = vmatpush1.bf16.msra.mxu0 0
      %480 = vmatprep.subr.bf16.mxu0 0
      %481 = vmatpush1.bf16.msra.mxu0 0
      %482 = vmatprep.subr.bf16.mxu0 0
      %483 = vmatpush1.bf16.msra.mxu0 0
      %484 = vmatprep.subr.bf16.mxu0 0
      %485 = vmatpush1.bf16.msra.mxu0 0
      %486 = vmatprep.subr.bf16.mxu0 0
      %487 = vmatpush1.bf16.msra.mxu0 0
      %488 = vmatprep.subr.bf16.mxu0 0
      %489 = vmatpush1.bf16.msra.mxu0 0
      %490 = vmatprep.subr.bf16.mxu0 0
      %491 = vmatpush1.bf16.msra.mxu0 0
      %492 = vmatprep.subr.bf16.mxu0 0
      %493 = vmatpush1.bf16.msra.mxu0 0
      %494 = vmatprep.subr.bf16.mxu0 0
      %495 = vmatpush1.bf16.msra.mxu0 0
      %496 = vmatprep.subr.bf16.mxu0 0
      %497 = vmatpush1.bf16.msra.mxu0 0
      %498 = vmatprep.subr.bf16.mxu0 0
      %499 = vmatpush1.bf16.msra.mxu0 0
      %500 = vmatprep.subr.bf16.mxu0 0
      %501 = vmatpush1.bf16.msra.mxu0 0
      %502 = vmatprep.subr.bf16.mxu0 0
      %503 = vmatpush1.bf16.msra.mxu0 0
      %504 = vmatprep.mubr.bf16.mxu0 0
      %505 = vmatmul.mubr.bf16.gmra.mrb[0].mxu0 %v467
      %v506 = vpop.f32.mrb[0].mxu0
      %v507 = vadd.f32 0.0, %v506
      %v508 = vpop.f32.mrb[0].mxu0
      %v509 = vpop.f32.mrb[0].mxu0
      %v510 = vpop.f32.mrb[0].mxu0
      %511 = vdwg.mxu0
      %512 = vrot.lane.b32.xlu0 %v282, 112
      %v513 = vpop.permute.xlu0 %512
      %514 = vrot.lane.b32.xlu0 %v283, 80
      %v515 = vpop.permute.xlu0 %514
      %v517 = vsel %vm293, %v513, 0
      %v520 = vsel %vm293, %v515, 0
      %522 = vmatprep.subr.bf16.mxu0 0
      %523 = vmatpush1.bf16.xpose.msra.mxu0 %v520
      %524 = vmatprep.subr.bf16.mxu0 0
      %525 = vmatpush1.bf16.xpose.msra.mxu0 0
      %526 = vmatprep.subr.bf16.mxu0 0
      %527 = vmatpush1.bf16.xpose.msra.mxu0 0
      %528 = vmatprep.subr.bf16.mxu0 0
      %529 = vmatpush1.bf16.xpose.msra.mxu0 0
      %530 = vmatprep.subr.bf16.mxu0 0
      %531 = vmatpush1.bf16.xpose.msra.mxu0 0
      %532 = vmatprep.subr.bf16.mxu0 0
      %533 = vmatpush1.bf16.xpose.msra.mxu0 0
      %534 = vmatprep.subr.bf16.mxu0 0
      %535 = vmatpush1.bf16.xpose.msra.mxu0 0
      %536 = vmatprep.subr.bf16.mxu0 0
      %537 = vmatpush1.bf16.xpose.msra.mxu0 0
      %538 = vmatprep.subr.bf16.mxu0 0
      %539 = vmatpush1.bf16.xpose.msra.mxu0 0
      %540 = vmatprep.subr.bf16.mxu0 0
      %541 = vmatpush1.bf16.xpose.msra.mxu0 0
      %542 = vmatprep.subr.bf16.mxu0 0
      %543 = vmatpush1.bf16.xpose.msra.mxu0 0
      %544 = vmatprep.subr.bf16.mxu0 0
      %545 = vmatpush1.bf16.xpose.msra.mxu0 0
      %546 = vmatprep.subr.bf16.mxu0 0
      %547 = vmatpush1.bf16.xpose.msra.mxu0 0
      %548 = vmatprep.subr.bf16.mxu0 0
      %549 = vmatpush1.bf16.xpose.msra.mxu0 0
      %550 = vmatprep.subr.bf16.mxu0 0
      %551 = vmatpush1.bf16.xpose.msra.mxu0 0
      %552 = vmatprep.subr.bf16.mxu0 0
      %553 = vmatpush1.bf16.xpose.msra.mxu0 0
      %554 = vmatprep.mubr.bf16.mxu0 0
      %555 = vmatmul.mubr.bf16.gmra.mrb[0].mxu0 %v517
      %v556 = vpop.f32.mrb[0].mxu0
      %v557 = vadd.f32 %v288, %v556
      %v558 = vpop.f32.mrb[0].mxu0
      %v559 = vpop.f32.mrb[0].mxu0
      %v560 = vpop.f32.mrb[0].mxu0
      %561 = vdwg.mxu0
      %v562 = vsel %vm293, %v557, -inf
      %563 = vmax.xlane.f32.xlu0 %v562
      %v564 = vpop.xlane.xlu0 %563
      %v565 = vsub.f32 %v557, %v564
      %v566 = vmul.f32 %v565, 1.442695
      %v567 = vpow.pop %v566
      %v568 = vsel %vm293, %v567, 0.0
      %569 = vadd.xlane.f32.xlu0 %v568
      %v570 = vpop.xlane.xlu0 %569
      %v571 = vrcp.pop %v570
      %v572 = vmul.f32 %v567, %v571
      %v573 = vpack.c.bf16 %v572, %v572
      %574 = vrot.lane.b32.xlu0 %v283, 48
      %v575 = vpop.permute.xlu0 %574
      %v577 = vsel %vm293, %v573, 0
      %v580 = vsel %vm357, %v575, 0
      %582 = vmatprep.subr.bf16.mxu0 0
      %583 = vmatpush1.bf16.msra.mxu0 %v580
      %584 = vmatprep.subr.bf16.mxu0 0
      %585 = vmatpush1.bf16.msra.mxu0 0
      %586 = vmatprep.subr.bf16.mxu0 0
      %587 = vmatpush1.bf16.msra.mxu0 0
      %588 = vmatprep.subr.bf16.mxu0 0
      %589 = vmatpush1.bf16.msra.mxu0 0
      %590 = vmatprep.subr.bf16.mxu0 0
      %591 = vmatpush1.bf16.msra.mxu0 0
      %592 = vmatprep.subr.bf16.mxu0 0
      %593 = vmatpush1.bf16.msra.mxu0 0
      %594 = vmatprep.subr.bf16.mxu0 0
      %595 = vmatpush1.bf16.msra.mxu0 0
      %596 = vmatprep.subr.bf16.mxu0 0
      %597 = vmatpush1.bf16.msra.mxu0 0
      %598 = vmatprep.subr.bf16.mxu0 0
      %599 = vmatpush1.bf16.msra.mxu0 0
      %600 = vmatprep.subr.bf16.mxu0 0
      %601 = vmatpush1.bf16.msra.mxu0 0
      %602 = vmatprep.subr.bf16.mxu0 0
      %603 = vmatpush1.bf16.msra.mxu0 0
      %604 = vmatprep.subr.bf16.mxu0 0
      %605 = vmatpush1.bf16.msra.mxu0 0
      %606 = vmatprep.subr.bf16.mxu0 0
      %607 = vmatpush1.bf16.msra.mxu0 0
      %608 = vmatprep.subr.bf16.mxu0 0
      %609 = vmatpush1.bf16.msra.mxu0 0
      %610 = vmatprep.subr.bf16.mxu0 0
      %611 = vmatpush1.bf16.msra.mxu0 0
      %612 = vmatprep.subr.bf16.mxu0 0
      %613 = vmatpush1.bf16.msra.mxu0 0
      %614 = vmatprep.mubr.bf16.mxu0 0
      %615 = vmatmul.mubr.bf16.gmra.mrb[0].mxu0 %v577
      %v616 = vpop.f32.mrb[0].mxu0
      %v617 = vadd.f32 0.0, %v616
      %v618 = vpop.f32.mrb[0].mxu0
      %v619 = vpop.f32.mrb[0].mxu0
      %v620 = vpop.f32.mrb[0].mxu0
      %621 = vdwg.mxu0
      %622 = vrot.lane.b32.xlu0 %v282, 104
      %v623 = vpop.permute.xlu0 %622
      %624 = vrot.lane.b32.xlu0 %v283, 72
      %v625 = vpop.permute.xlu0 %624
      %v627 = vsel %vm293, %v623, 0
      %v630 = vsel %vm293, %v625, 0
      %632 = vmatprep.subr.bf16.mxu0 0
      %633 = vmatpush1.bf16.xpose.msra.mxu0 %v630
      %634 = vmatprep.subr.bf16.mxu0 0
      %635 = vmatpush1.bf16.xpose.msra.mxu0 0
      %636 = vmatprep.subr.bf16.mxu0 0
      %637 = vmatpush1.bf16.xpose.msra.mxu0 0
      %638 = vmatprep.subr.bf16.mxu0 0
      %639 = vmatpush1.bf16.xpose.msra.mxu0 0
      %640 = vmatprep.subr.bf16.mxu0 0
      %641 = vmatpush1.bf16.xpose.msra.mxu0 0
      %642 = vmatprep.subr.bf16.mxu0 0
      %643 = vmatpush1.bf16.xpose.msra.mxu0 0
      %644 = vmatprep.subr.bf16.mxu0 0
      %645 = vmatpush1.bf16.xpose.msra.mxu0 0
      %646 = vmatprep.subr.bf16.mxu0 0
      %647 = vmatpush1.bf16.xpose.msra.mxu0 0
      %648 = vmatprep.subr.bf16.mxu0 0
      %649 = vmatpush1.bf16.xpose.msra.mxu0 0
      %650 = vmatprep.subr.bf16.mxu0 0
      %651 = vmatpush1.bf16.xpose.msra.mxu0 0
      %652 = vmatprep.subr.bf16.mxu0 0
      %653 = vmatpush1.bf16.xpose.msra.mxu0 0
      %654 = vmatprep.subr.bf16.mxu0 0
      %655 = vmatpush1.bf16.xpose.msra.mxu0 0
      %656 = vmatprep.subr.bf16.mxu0 0
      %657 = vmatpush1.bf16.xpose.msra.mxu0 0
      %658 = vmatprep.subr.bf16.mxu0 0
      %659 = vmatpush1.bf16.xpose.msra.mxu0 0
      %660 = vmatprep.subr.bf16.mxu0 0
      %661 = vmatpush1.bf16.xpose.msra.mxu0 0
      %662 = vmatprep.subr.bf16.mxu0 0
      %663 = vmatpush1.bf16.xpose.msra.mxu0 0
      %664 = vmatprep.mubr.bf16.mxu0 0
      %665 = vmatmul.mubr.bf16.gmra.mrb[0].mxu0 %v627
      %v666 = vpop.f32.mrb[0].mxu0
      %v667 = vadd.f32 %v288, %v666
      %v668 = vpop.f32.mrb[0].mxu0
      %v669 = vpop.f32.mrb[0].mxu0
      %v670 = vpop.f32.mrb[0].mxu0
      %671 = vdwg.mxu0
      %v672 = vsel %vm293, %v667, -inf
      %673 = vmax.xlane.f32.xlu0 %v672
      %v674 = vpop.xlane.xlu0 %673
      %v675 = vsub.f32 %v667, %v674
      %v676 = vmul.f32 %v675, 1.442695
      %v677 = vpow.pop %v676
      %v678 = vsel %vm293, %v677, 0.0
      %679 = vadd.xlane.f32.xlu0 %v678
      %v680 = vpop.xlane.xlu0 %679
      %v681 = vrcp.pop %v680
      %v682 = vmul.f32 %v677, %v681
      %v683 = vpack.c.bf16 %v682, %v682
      %684 = vrot.lane.b32.xlu0 %v283, 40
      %v685 = vpop.permute.xlu0 %684
      %v687 = vsel %vm293, %v683, 0
      %v690 = vsel %vm357, %v685, 0
      %692 = vmatprep.subr.bf16.mxu0 0
      %693 = vmatpush1.bf16.msra.mxu0 %v690
      %694 = vmatprep.subr.bf16.mxu0 0
      %695 = vmatpush1.bf16.msra.mxu0 0
      %696 = vmatprep.subr.bf16.mxu0 0
      %697 = vmatpush1.bf16.msra.mxu0 0
      %698 = vmatprep.subr.bf16.mxu0 0
      %699 = vmatpush1.bf16.msra.mxu0 0
      %700 = vmatprep.subr.bf16.mxu0 0
      %701 = vmatpush1.bf16.msra.mxu0 0
      %702 = vmatprep.subr.bf16.mxu0 0
      %703 = vmatpush1.bf16.msra.mxu0 0
      %704 = vmatprep.subr.bf16.mxu0 0
      %705 = vmatpush1.bf16.msra.mxu0 0
      %706 = vmatprep.subr.bf16.mxu0 0
      %707 = vmatpush1.bf16.msra.mxu0 0
      %708 = vmatprep.subr.bf16.mxu0 0
      %709 = vmatpush1.bf16.msra.mxu0 0
      %710 = vmatprep.subr.bf16.mxu0 0
      %711 = vmatpush1.bf16.msra.mxu0 0
      %712 = vmatprep.subr.bf16.mxu0 0
      %713 = vmatpush1.bf16.msra.mxu0 0
      %714 = vmatprep.subr.bf16.mxu0 0
      %715 = vmatpush1.bf16.msra.mxu0 0
      %716 = vmatprep.subr.bf16.mxu0 0
      %717 = vmatpush1.bf16.msra.mxu0 0
      %718 = vmatprep.subr.bf16.mxu0 0
      %719 = vmatpush1.bf16.msra.mxu0 0
      %720 = vmatprep.subr.bf16.mxu0 0
      %721 = vmatpush1.bf16.msra.mxu0 0
      %722 = vmatprep.subr.bf16.mxu0 0
      %723 = vmatpush1.bf16.msra.mxu0 0
      %724 = vmatprep.mubr.bf16.mxu0 0
      %725 = vmatmul.mubr.bf16.gmra.mrb[0].mxu0 %v687
      %v726 = vpop.f32.mrb[0].mxu0
      %v727 = vadd.f32 0.0, %v726
      %v728 = vpop.f32.mrb[0].mxu0
      %v729 = vpop.f32.mrb[0].mxu0
      %v730 = vpop.f32.mrb[0].mxu0
      %731 = vdwg.mxu0
      %733 = vrot.lane.b32.xlu0 %v507, 8
      %v734 = vpop.permute.xlu0 %733
      %737 = vrot.lane.b32.xlu0 %v617, 16
      %v738 = vpop.permute.xlu0 %737
      %741 = vrot.lane.b32.xlu0 %v727, 24
      %v742 = vpop.permute.xlu0 %741
      %v744 = vsel %vm293, %v396, %v734
      %vm745 = vcmask 130048
      %v746 = vsel %vm745, %v744, %v738
      %vm747 = vcmask 195584
      %v748 = vsel %vm747, %v746, %v742
      %749 = vst.msk [vmem:[%s206] sm:$0xff] %vm233, %v748
      %p750 = scmp.lt.s32.totalorder %s15, 1
      %s751 = scalar_select %p750, %s15, 1
      %s752 = smul.addr %s751, 8
      %s753 = scalar_lea.vmem %s4, %s752
      // Predicated region
      $region37: #{simple_bert_forward.11} parent=35 // pred_check
        %p754 = pneg %p127
      $region38: #{simple_bert_forward.11} parent=35 // pred_check_branch
        %756 = sbr.rel (%p754) target = $region40
      $region39: #{simple_bert_forward.11} parent=35 // pred_region
        _
      $region40: #{simple_bert_forward.11} parent=35 // pred_fallthru
        _
    $region36: #{simple_bert_forward.11} parent=5 // pred_fallthru
      _
    %p757 = scmp.le.s32.totalorder 2, %s10
    // Predicated region
    $region41: #{simple_bert_forward.11} parent=5 // pred_check
      %p758 = pneg %p757
    $region42: #{simple_bert_forward.11} parent=5 // pred_check_branch
      %760 = sbr.rel (%p758) target = $region44
    $region43: #{simple_bert_forward.11} parent=5 // pred_region
      %s761 = ssub.s32 %s10, 2
      // Predicated region
      $region45: #{simple_bert_forward.11} parent=43 // pred_check
        %p762 = pneg %p133
      $region46: #{simple_bert_forward.11} parent=43 // pred_check_branch
        %764 = sbr.rel (%p762) target = $region48
      $region47: #{simple_bert_forward.11} parent=43 // pred_region
        %p765 = scmp.lt.s32.totalorder %s16, 1
        %s766 = scalar_select %p765, %s16, 1
        %s767 = smul.addr %s766, 8
        %s768 = scalar_lea.vmem %s4, %s767
      $region48: #{simple_bert_forward.11} parent=43 // pred_fallthru
        _
    $region44: #{simple_bert_forward.11} parent=5 // pred_fallthru
      _
  $region6: #{simple_bert_forward.11} parent=0 // loop_footer
    %s14 = sadd.s32 1, %s10
  $region7: #{simple_bert_forward.11} parent=0 // loop_footer_branch
    %9 = sbr.rel target = $region3
  $region8: #{simple_bert_forward.11} parent=0 // loop_exit
    _

// kernel: simple_bert_forward.14
$region0: #{simple_bert_forward.14}
  #allocation0 [shape = 'u32[]', space=smem, size = 0x4, offset = 0x4, fixed_abs, tag = 'smem constant byte address 0x4 - core index']
  #allocation1 [shape = 'u32[144,128]{1,0:T(1,128)}', space=vmem, size = 0x12000, scoped, tag = 'internal scratch']
  %s0 = inlined_call_operand.vmem [shape: f32[16,64], index: 0, kind: input, shape index: {}]
  %s1 = inlined_call_operand.vmem [shape: bf16[64,32], index: 1, kind: input, shape index: {}]
  %s2 = inlined_call_operand.vmem [shape: f32[1,32], index: 2, kind: input, shape index: {}]
  %s3 = inlined_call_operand.vmem [shape: f32[16,32], index: 3, kind: input, shape index: {}]
  %s4 = inlined_call_operand.vmem [shape: f32[1,32], index: 4, kind: input, shape index: {}]
  %s5 = inlined_call_operand.vmem [shape: f32[1,32], index: 5, kind: input, shape index: {}]
  %s6 = inlined_call_operand.vmem [shape: f32[16,32], index: 6, kind: output, shape index: {}]
  %s7 = sld [smem:[#allocation0]]
  $region34: #{simple_bert_forward.14} parent=0
    _
  %s9 = ssub.s32 1, %s7
  %s10 = scalar_select 0, %s9, %s7
  // Predicated region
  $region2: #{simple_bert_forward.14} parent=0 // pred_check
    _
  $region3: #{simple_bert_forward.14} parent=0 // pred_check_branch
    %12 = sbr.rel (0) target = $region5
  $region4: #{simple_bert_forward.14} parent=0 // pred_region
    _
  $region5: #{simple_bert_forward.14} parent=0 // pred_fallthru
    _
  // Predicated region
  $region6: #{simple_bert_forward.14} parent=0 // pred_check
    _
  $region7: #{simple_bert_forward.14} parent=0 // pred_check_branch
    %14 = sbr.rel (0) target = $region9
  $region8: #{simple_bert_forward.14} parent=0 // pred_region
    _
  $region9: #{simple_bert_forward.14} parent=0 // pred_fallthru
    _
  // Predicated region
  $region10: #{simple_bert_forward.14} parent=0 // pred_check
    _
  $region11: #{simple_bert_forward.14} parent=0 // pred_check_branch
    %16 = sbr.rel (0) target = $region13
  $region12: #{simple_bert_forward.14} parent=0 // pred_region
    _
  $region13: #{simple_bert_forward.14} parent=0 // pred_fallthru
    _
  // Predicated region
  $region14: #{simple_bert_forward.14} parent=0 // pred_check
    _
  $region15: #{simple_bert_forward.14} parent=0 // pred_check_branch
    %18 = sbr.rel (0) target = $region17
  $region16: #{simple_bert_forward.14} parent=0 // pred_region
    _
  $region17: #{simple_bert_forward.14} parent=0 // pred_fallthru
    _
  // Predicated region
  $region18: #{simple_bert_forward.14} parent=0 // pred_check
    _
  $region19: #{simple_bert_forward.14} parent=0 // pred_check_branch
    %20 = sbr.rel (0) target = $region21
  $region20: #{simple_bert_forward.14} parent=0 // pred_region
    _
  $region21: #{simple_bert_forward.14} parent=0 // pred_fallthru
    _
  // Predicated region
  $region22: #{simple_bert_forward.14} parent=0 // pred_check
    _
  $region23: #{simple_bert_forward.14} parent=0 // pred_check_branch
    %22 = sbr.rel (0) target = $region25
  $region24: #{simple_bert_forward.14} parent=0 // pred_region
    _
  $region25: #{simple_bert_forward.14} parent=0 // pred_fallthru
    _
  %v24 = vld [vmem:[%s0] sm:$0xff]
  %v25 = vld [vmem:[%s0 + $0x8] sm:$0xff]
  %v26 = vpack.c.bf16 %v25, %v24
  %v27 = vld [vmem:[%s1] sm:$0xf]
  %v28 = vld [vmem:[%s1 + $0x4] sm:$0xf]
  %v29 = vld [vmem:[%s1 + $0x8] sm:$0xf]
  %v30 = vld [vmem:[%s1 + $0xc] sm:$0xf]
  %v31 = vld [vmem:[%s1 + $0x10] sm:$0xf]
  %v32 = vld [vmem:[%s1 + $0x14] sm:$0xf]
  %v33 = vld [vmem:[%s1 + $0x18] sm:$0xf]
  %v34 = vld [vmem:[%s1 + $0x1c] sm:$0xf]
  %v35 = vld [vmem:[%s2] sm:$0x1]
  %v37 = vlaneseq
  %v38 = vshrl.u32 %v37, 7
  %v39 = vsub.s32 0, %v38
  %v40 = vrot.slane %v35, %v39
  %v50 = vunpack.c.l.b16 %v27
  %v51 = vunpack.c.l.b16 %v28
  %v52 = vunpack.c.l.b16 %v29
  %v53 = vunpack.c.l.b16 %v30
  %v54 = vunpack.c.l.b16 %v31
  %v55 = vunpack.c.l.b16 %v32
  %v56 = vunpack.c.l.b16 %v33
  %v57 = vunpack.c.l.b16 %v34
  %v58 = vpack.c.b16 %v51, %v50
  %v59 = vpack.c.b16 %v53, %v52
  %v60 = vpack.c.b16 %v55, %v54
  %v61 = vpack.c.b16 %v57, %v56
  %vm66 = vcmask 523264
  %v68 = vsel %vm66, %v26, 0
  %70 = vmatprep.subr.bf16.mxu0 0
  %71 = vmatpush1.bf16.msra.mxu0 %v58
  %72 = vmatprep.subr.bf16.mxu0 0
  %73 = vmatpush1.bf16.msra.mxu0 %v59
  %74 = vmatprep.subr.bf16.mxu0 0
  %75 = vmatpush1.bf16.msra.mxu0 %v60
  %76 = vmatprep.subr.bf16.mxu0 0
  %77 = vmatpush1.bf16.msra.mxu0 %v61
  %78 = vmatprep.subr.bf16.mxu0 0
  %79 = vmatpush1.bf16.msra.mxu0 0
  %80 = vmatprep.subr.bf16.mxu0 0
  %81 = vmatpush1.bf16.msra.mxu0 0
  %82 = vmatprep.subr.bf16.mxu0 0
  %83 = vmatpush1.bf16.msra.mxu0 0
  %84 = vmatprep.subr.bf16.mxu0 0
  %85 = vmatpush1.bf16.msra.mxu0 0
  %86 = vmatprep.subr.bf16.mxu0 0
  %87 = vmatpush1.bf16.msra.mxu0 0
  %88 = vmatprep.subr.bf16.mxu0 0
  %89 = vmatpush1.bf16.msra.mxu0 0
  %90 = vmatprep.subr.bf16.mxu0 0
  %91 = vmatpush1.bf16.msra.mxu0 0
  %92 = vmatprep.subr.bf16.mxu0 0
  %93 = vmatpush1.bf16.msra.mxu0 0
  %94 = vmatprep.subr.bf16.mxu0 0
  %95 = vmatpush1.bf16.msra.mxu0 0
  %96 = vmatprep.subr.bf16.mxu0 0
  %97 = vmatpush1.bf16.msra.mxu0 0
  %98 = vmatprep.subr.bf16.mxu0 0
  %99 = vmatpush1.bf16.msra.mxu0 0
  %100 = vmatprep.subr.bf16.mxu0 0
  %101 = vmatpush1.bf16.msra.mxu0 0
  %102 = vmatprep.mubr.bf16.mxu0 0
  %103 = vmatmul.mubr.bf16.gmra.mrb[0].mxu0 %v68
  %v104 = vpop.f32.mrb[0].mxu0
  %v105 = vadd.f32 %v40, %v104
  %v106 = vpop.f32.mrb[0].mxu0
  %v107 = vpop.f32.mrb[0].mxu0
  %v108 = vadd.f32 %v40, %v107
  %v109 = vpop.f32.mrb[0].mxu0
  %110 = vdwg.mxu0
  %v111 = vld [vmem:[%s3] sm:$0xff]
  %v112 = vld [vmem:[%s3 + $0x8] sm:$0xff]
  %v113 = vadd.f32 %v105, %v111
  %v114 = vadd.f32 %v108, %v112
  %vm115 = vcmask 261120
  %v116 = vsel %vm115, %v113, 0.0
  %117 = vadd.xlane.f32.xlu0 %v116
  %v118 = vpop.xlane.xlu0 %117
  %v119 = vsel %vm115, %v114, 0.0
  %120 = vadd.xlane.f32.xlu0 %v119
  %v121 = vpop.xlane.xlu0 %120
  %v122 = vrcp.pop 32.0
  %v123 = vmul.f32 %v118, %v122
  %v124 = vmul.f32 %v121, %v122
  %v125 = vsub.f32 %v113, %v123
  %v126 = vsub.f32 %v114, %v124
  %v127 = vmul.f32 %v125, %v125
  %v128 = vmul.f32 %v126, %v126
  %v129 = vsel %vm115, %v127, 0.0
  %130 = vadd.xlane.f32.xlu0 %v129
  %v131 = vpop.xlane.xlu0 %130
  %v132 = vsel %vm115, %v128, 0.0
  %133 = vadd.xlane.f32.xlu0 %v132
  %v134 = vpop.xlane.xlu0 %133
  %v135 = vmul.f32 %v131, %v122
  %v136 = vmul.f32 %v134, %v122
  %v137 = vadd.f32 %v135, 1e-12
  %v138 = vadd.f32 %v136, 1e-12
  %v139 = vrsqrt.pop %v137
  %v140 = vrsqrt.pop %v138
  %v141 = vmul.f32 %v125, %v139
  %v142 = vmul.f32 %v126, %v140
  %v143 = vld [vmem:[%s4] sm:$0x1]
  %v145 = vlaneseq
  %v146 = vshrl.u32 %v145, 7
  %v147 = vsub.s32 0, %v146
  %v148 = vrot.slane %v143, %v147
  %v150 = vmul.f32 %v141, %v148
  %v151 = vmul.f32 %v142, %v148
  %v152 = vld [vmem:[%s5] sm:$0x1]
  %v154 = vlaneseq
  %v155 = vshrl.u32 %v154, 7
  %v156 = vsub.s32 0, %v155
  %v157 = vrot.slane %v152, %v156
  %v159 = vadd.f32 %v150, %v157
  %v160 = vadd.f32 %v151, %v157
  %161 = vst.msk [vmem:[%s6] sm:$0xff] %vm115, %v159
  %162 = vst.msk [vmem:[%s6 + $0x8] sm:$0xff] %vm115, %v160
  // Predicated region
  $region26: #{simple_bert_forward.14} parent=0 // pred_check
    _
  $region27: #{simple_bert_forward.14} parent=0 // pred_check_branch
    %164 = sbr.rel (0) target = $region29
  $region28: #{simple_bert_forward.14} parent=0 // pred_region
    _
  $region29: #{simple_bert_forward.14} parent=0 // pred_fallthru
    _
  // Predicated region
  $region30: #{simple_bert_forward.14} parent=0 // pred_check
    _
  $region31: #{simple_bert_forward.14} parent=0 // pred_check_branch
    %166 = sbr.rel (0) target = $region33
  $region32: #{simple_bert_forward.14} parent=0 // pred_region
    _
  $region33: #{simple_bert_forward.14} parent=0 // pred_fallthru
    _

// kernel: simple_bert_forward.19
$region0: #{simple_bert_forward.19}
  #allocation0 [shape = 'u32[]', space=smem, size = 0x4, offset = 0x4, fixed_abs, tag = 'smem constant byte address 0x4 - core index']
  #allocation1 [shape = 'u32[144,128]{1,0:T(1,128)}', space=vmem, size = 0x12000, scoped, tag = 'internal scratch']
  %s0 = inlined_call_operand.vmem [shape: f32[2,32], index: 0, kind: input, shape index: {}]
  %s1 = inlined_call_operand.vmem [shape: bf16[32,32], index: 1, kind: input, shape index: {}]
  %s2 = inlined_call_operand.vmem [shape: f32[1,32], index: 2, kind: input, shape index: {}]
  %s3 = inlined_call_operand.hbm [shape: f32[2,32], index: 3, kind: output, shape index: {}]
  %s4 = sld [smem:[#allocation0]]
  $region22: #{simple_bert_forward.19} parent=0
    _
  %s6 = ssub.s32 1, %s4
  %s7 = scalar_select 0, %s6, %s4
  $region1: #{simple_bert_forward.19} parent=0
    #allocation2 [shape = 'u8[1024]{0}', space=vmem, size = 0x400, scoped, tag = 'output window, operand 0, single buffered']
    #allocation3 [shape = 's32[1]{0}', space=sflag, size = 0x4, scoped, tag = 'scoped memory for simple_bert_forward.19']
    %8 = vsyncpa [#allocation3], 0
    // Predicated region
    $region2: #{simple_bert_forward.19} parent=1 // pred_check
      _
    $region3: #{simple_bert_forward.19} parent=1 // pred_check_branch
      %10 = sbr.rel (0) target = $region5
    $region4: #{simple_bert_forward.19} parent=1 // pred_region
      _
    $region5: #{simple_bert_forward.19} parent=1 // pred_fallthru
      _
    // Predicated region
    $region6: #{simple_bert_forward.19} parent=1 // pred_check
      _
    $region7: #{simple_bert_forward.19} parent=1 // pred_check_branch
      %12 = sbr.rel (0) target = $region9
    $region8: #{simple_bert_forward.19} parent=1 // pred_region
      _
    $region9: #{simple_bert_forward.19} parent=1 // pred_fallthru
      _
    // Predicated region
    $region10: #{simple_bert_forward.19} parent=1 // pred_check
      _
    $region11: #{simple_bert_forward.19} parent=1 // pred_check_branch
      %14 = sbr.rel (0) target = $region13
    $region12: #{simple_bert_forward.19} parent=1 // pred_region
      _
    $region13: #{simple_bert_forward.19} parent=1 // pred_fallthru
      _
    %v16 = vld [vmem:[%s0] sm:$0x3]
    %v17 = vpack.c.bf16 %v16, %v16
    %v18 = vld [vmem:[%s1] sm:$0xf]
    %v19 = vld [vmem:[%s1 + $0x4] sm:$0xf]
    %v20 = vld [vmem:[%s1 + $0x8] sm:$0xf]
    %v21 = vld [vmem:[%s1 + $0xc] sm:$0xf]
    %v22 = vld [vmem:[%s2] sm:$0x1]
    %v24 = vlaneseq
    %v25 = vshrl.u32 %v24, 7
    %v26 = vsub.s32 0, %v25
    %v27 = vrot.slane %v22, %v26
    %v33 = vunpack.c.l.b16 %v18
    %v34 = vunpack.c.l.b16 %v19
    %v35 = vunpack.c.l.b16 %v20
    %v36 = vunpack.c.l.b16 %v21
    %v37 = vpack.c.b16 %v34, %v33
    %v38 = vpack.c.b16 %v36, %v35
    %vm41 = vcmask 261120
    %v43 = vsel %vm41, %v17, 0
    %45 = vmatprep.subr.bf16.mxu0 0
    %46 = vmatpush1.bf16.msra.mxu0 %v37
    %47 = vmatprep.subr.bf16.mxu0 0
    %48 = vmatpush1.bf16.msra.mxu0 %v38
    %49 = vmatprep.subr.bf16.mxu0 0
    %50 = vmatpush1.bf16.msra.mxu0 0
    %51 = vmatprep.subr.bf16.mxu0 0
    %52 = vmatpush1.bf16.msra.mxu0 0
    %53 = vmatprep.subr.bf16.mxu0 0
    %54 = vmatpush1.bf16.msra.mxu0 0
    %55 = vmatprep.subr.bf16.mxu0 0
    %56 = vmatpush1.bf16.msra.mxu0 0
    %57 = vmatprep.subr.bf16.mxu0 0
    %58 = vmatpush1.bf16.msra.mxu0 0
    %59 = vmatprep.subr.bf16.mxu0 0
    %60 = vmatpush1.bf16.msra.mxu0 0
    %61 = vmatprep.subr.bf16.mxu0 0
    %62 = vmatpush1.bf16.msra.mxu0 0
    %63 = vmatprep.subr.bf16.mxu0 0
    %64 = vmatpush1.bf16.msra.mxu0 0
    %65 = vmatprep.subr.bf16.mxu0 0
    %66 = vmatpush1.bf16.msra.mxu0 0
    %67 = vmatprep.subr.bf16.mxu0 0
    %68 = vmatpush1.bf16.msra.mxu0 0
    %69 = vmatprep.subr.bf16.mxu0 0
    %70 = vmatpush1.bf16.msra.mxu0 0
    %71 = vmatprep.subr.bf16.mxu0 0
    %72 = vmatpush1.bf16.msra.mxu0 0
    %73 = vmatprep.subr.bf16.mxu0 0
    %74 = vmatpush1.bf16.msra.mxu0 0
    %75 = vmatprep.subr.bf16.mxu0 0
    %76 = vmatpush1.bf16.msra.mxu0 0
    %77 = vmatprep.mubr.bf16.mxu0 0
    %78 = vmatmul.mubr.bf16.gmra.mrb[0].mxu0 %v43
    %v79 = vpop.f32.mrb[0].mxu0
    %v80 = vadd.f32 %v27, %v79
    %v81 = vpop.f32.mrb[0].mxu0
    %v82 = vpop.f32.mrb[0].mxu0
    %v83 = vpop.f32.mrb[0].mxu0
    %84 = vdwg.mxu0
    %v85 = vtanh.pop %v80
    %vm86 = vcmask 254976
    %87 = vst.msk [vmem:[#allocation2] sm:$0x3] %vm86, %v85
    // Predicated region
    $region14: #{simple_bert_forward.19} parent=1 // pred_check
      _
    $region15: #{simple_bert_forward.19} parent=1 // pred_check_branch
      %89 = sbr.rel (0) target = $region17
    $region16: #{simple_bert_forward.19} parent=1 // pred_region
      %s91 = ssub.s32 32, 32
      %92 = vsyncadd [#allocation3], %s91
      %s94 = sshll.u32 [#allocation2], 4
      %s95 = int_to_ptr.vmem [resolvable:$true] %s94
      %97 = dma.vmem_to_hbm [thread:$0]  %s95, 32, %s3, [#allocation3]
    $region17: #{simple_bert_forward.19} parent=1 // pred_fallthru
      _
    // Predicated region
    $region18: #{simple_bert_forward.19} parent=1 // pred_check
      _
    $region19: #{simple_bert_forward.19} parent=1 // pred_check_branch
      %99 = sbr.rel (0) target = $region21
    $region20: #{simple_bert_forward.19} parent=1 // pred_region
      %100 = dma.done [#allocation3], 32
    $region21: #{simple_bert_forward.19} parent=1 // pred_fallthru
      _
    %101 = vsyncpa [#allocation3], 1

</llo_original>
